<compile_context>
chip_gen: v5e
topology: v5e:2x2
jax: 0.10.0
libtpu: 0.0.40
codegen_flags: <defaults>
</compile_context>

<pallas_src>
import jax
import jax.numpy as jnp
from jax.experimental import pallas as pl
from jax.experimental.pallas import tpu as pltpu

COMPUTE_DTYPE = jnp.bfloat16          # MXU input dtype; accumulation is always f32
VMEM_LIMIT_BYTES = 32 * 1024 * 1024   # explicit budget, safe on v5e/v6e/v7x


def _round_up(x, m):
    return (x + m - 1) // m * m


# ----------------------------------------------------------------------------
# Kernel 1: both conv branches as one batched im2col matmul (+ bias + ReLU)
# ----------------------------------------------------------------------------
def _conv_branches_kernel(x_ref, w_ref, b_ref, o_ref):
    # x: (TM, K) bf16 patches, w: (K, Cout) bf16, b: (1, Cout) f32.
    acc = jnp.dot(x_ref[...], w_ref[...], preferred_element_type=jnp.float32)
    acc = acc + b_ref[...]                       # f32 epilogue (v5e-safe)
    o_ref[...] = jnp.maximum(acc, 0.0).astype(o_ref.dtype)


def conv_branches_matmul(patches, w_all, b_all, *, tm=256):
    """patches: (2, M, K); w_all: (2, K, Cout); b_all: (2, 1, Cout) -> (2, M, Cout)."""
    S, M, K = patches.shape
    Cout = w_all.shape[-1]
    tm = min(tm, M)
    grid = (S, pl.cdiv(M, tm))
    return pl.pallas_call(
        _conv_branches_kernel,
        out_shape=jax.ShapeDtypeStruct((S, M, Cout), jnp.float32),
        grid=grid,
        in_specs=[
            pl.BlockSpec((None, tm, K), lambda s, m: (s, m, 0)),
            pl.BlockSpec((None, K, Cout), lambda s, m: (s, 0, 0)),
            pl.BlockSpec((None, 1, Cout), lambda s, m: (s, 0, 0)),
        ],
        out_specs=pl.BlockSpec((None, tm, Cout), lambda s, m: (s, m, 0)),
        compiler_params=pltpu.CompilerParams(
            dimension_semantics=("parallel", "parallel"),
            vmem_limit_bytes=VMEM_LIMIT_BYTES,
        ),
    )(patches, w_all, b_all)


def build_conv_patches(images_stacked, k_pad):
    """images_stacked: (2, B, Cin, H, W) NCHW -> patches (2, B*Ho*Wo, k_pad) bf16.

    Column order is (ki*3 + kj)*Cin + ci, matching the conv weight layout made
    by prepare_params(); columns [9*Cin, k_pad) are zero padding.  Patches are
    produced directly in row-major (b, i, j) order -- no transposes after the
    matmul are needed.
    """
    S, B, Cin, H, W = images_stacked.shape
    Ho = (H + 2 - 3) // 2 + 1
    Wo = (W + 2 - 3) // 2 + 1
    x = images_stacked.transpose(0, 1, 3, 4, 2)                  # NHWC per branch
    xp = jnp.pad(x, ((0, 0), (0, 0), (1, 1), (1, 1), (0, 0)))
    cols = []
    for ki in range(3):
        for kj in range(3):
            cols.append(xp[:, :, ki:ki + 2 * Ho - 1:2, kj:kj + 2 * Wo - 1:2, :])
    if k_pad > 9 * Cin:
        cols.append(jnp.zeros((S, B, Ho, Wo, k_pad - 9 * Cin), x.dtype))
    patches = jnp.concatenate(cols, axis=-1)                     # (2,B,Ho,Wo,k_pad)
    return patches.reshape(S, B * Ho * Wo, k_pad).astype(COMPUTE_DTYPE)


# ----------------------------------------------------------------------------
# Kernel 2: fused reduction Linear + coordinate-classifier MLP
# ----------------------------------------------------------------------------
def _fused_head_kernel(xi_ref, xm_ref, wri_ref, wrm_ref, rb_ref,
                       w1_ref, b1_ref, w2_ref, b2_ref, w3_ref, b3_ref, o_ref):
    # reduction: Flatten + Linear.  The torch cat(dim=1)/NCHW-flatten permutation
    # is already folded into wri/wrm (see prepare_params), so it is just two
    # dots into one f32 accumulator.
    xi = xi_ref[...].astype(COMPUTE_DTYPE)
    xm = xm_ref[...].astype(COMPUTE_DTYPE)
    red = jnp.dot(xi, wri_ref[...], preferred_element_type=jnp.float32)
    red = red + jnp.dot(xm, wrm_ref[...], preferred_element_type=jnp.float32)
    red = red + rb_ref[...]
    # coordinate classifier MLP (tiny dims, kept in f32 / vregs).
    h = jnp.dot(red, w1_ref[...], preferred_element_type=jnp.float32) + b1_ref[...]
    h = jnp.maximum(h, 0.0)
    h = jnp.dot(h, w2_ref[...], preferred_element_type=jnp.float32) + b2_ref[...]
    h = jnp.maximum(h, 0.0)
    out = jnp.dot(h, w3_ref[...], preferred_element_type=jnp.float32) + b3_ref[...]
    o_ref[...] = out.astype(o_ref.dtype)


def fused_reduction_classifier(flat_img, flat_msk, kp):
    B = flat_img.shape[0]
    out_dim = kp["cls_w3"].shape[1]
    operands = (
        flat_img, flat_msk,
        kp["w_red_img"], kp["w_red_msk"], kp["red_b"],
        kp["cls_w1"], kp["cls_b1"],
        kp["cls_w2"], kp["cls_b2"],
        kp["cls_w3"], kp["cls_b3"],
    )
    # Whole-array VMEM blocks: the entire weight set is well under 256 KiB here.
    in_specs = [pl.BlockSpec(op.shape, lambda i: (0, 0)) for op in operands]
    return pl.pallas_call(
        _fused_head_kernel,
        out_shape=jax.ShapeDtypeStruct((B, out_dim), jnp.float32),
        grid=(1,),
        in_specs=in_specs,
        out_specs=pl.BlockSpec((B, out_dim), lambda i: (0, 0)),
        compiler_params=pltpu.CompilerParams(
            dimension_semantics=("arbitrary",),
            vmem_limit_bytes=VMEM_LIMIT_BYTES,
        ),
    )(*operands)


# ----------------------------------------------------------------------------
# MaskedCoordinatePredictor forward
# ----------------------------------------------------------------------------
def masked_coordinate_predictor_forward(kparams, image, masked_image):
    B = image.shape[0]
    # Both encoder branches share shapes -> stack on a leading "branch" axis and
    # run them in one Pallas call.
    images = jnp.stack((image, masked_image), axis=0)            # (2, B, Cin, H, W)
    k_pad = kparams["conv_w"].shape[1]
    patches = build_conv_patches(images, k_pad)                  # (2, B*Ho*Wo, K)
    enc = conv_branches_matmul(patches, kparams["conv_w"], kparams["conv_b"])
    # (2, B*Ho*Wo, Cout) row-major == per-branch NHWC flatten; reshape is a view.
    S, M, Cout = enc.shape
    enc = enc.reshape(S, B, (M // B) * Cout)
    return fused_reduction_classifier(enc[0], enc[1], kparams)


# ----------------------------------------------------------------------------
# Parameters: torch-layout init + one-time layout folding for the kernels
# ----------------------------------------------------------------------------
def init_params(key, *, cin=3, cenc=8, hw=16, image_embedding=32, hidden=32):
    """Parameters in torch layout (conv OIHW, reduction weight over NCHW flatten)."""
    ho = (hw + 2 - 3) // 2 + 1
    flat_dim = 2 * cenc * ho * ho
    ks = jax.random.split(key, 6)

    def lin(k, fan_in, fan_out):
        scale = 1.0 / jnp.sqrt(fan_in)
        return jax.random.uniform(k, (fan_in, fan_out), jnp.float32, -scale, scale)

    return {
        "enc_w": jax.random.normal(ks[0], (cenc, cin, 3, 3), jnp.float32) * 0.1,
        "enc_b": jnp.zeros((cenc,), jnp.float32),
        "menc_w": jax.random.normal(ks[1], (cenc, cin, 3, 3), jnp.float32) * 0.1,
        "menc_b": jnp.zeros((cenc,), jnp.float32),
        "red_w": lin(ks[2], flat_dim, image_embedding),
        "red_b": jnp.zeros((image_embedding,), jnp.float32),
        "cls_w1": lin(ks[3], image_embedding, hidden),
        "cls_b1": jnp.zeros((hidden,), jnp.float32),
        "cls_w2": lin(ks[4], hidden, hidden),
        "cls_b2": jnp.zeros((hidden,), jnp.float32),
        "cls_w3": lin(ks[5], hidden, 2),
        "cls_b3": jnp.zeros((2,), jnp.float32),
    }


def prepare_params(tp):
    """One-time layout folding: conv weights to (branch, K_pad, Cout) im2col form,
    torch NCHW-flatten/concat permutation folded into the reduction weight."""
    cenc, cin = tp["enc_w"].shape[0], tp["enc_w"].shape[1]
    k_pad = _round_up(9 * cin, 8)

    def prep_conv_w(w):
        # (Cout, Cin, 3, 3) -> (k_pad, Cout), row order (ki*3 + kj)*Cin + ci.
        cout = w.shape[0]
        w2 = w.transpose(2, 3, 1, 0).reshape(9 * cin, cout)
        return jnp.pad(w2, ((0, k_pad - 9 * cin), (0, 0))).astype(COMPUTE_DTYPE)

    hw_prod = tp["red_w"].shape[0] // (2 * cenc)      # = Ho * Wo
    emb = tp["red_w"].shape[1]
    half = cenc * hw_prod

    def prep_red(red_half):
        # torch rows f = c*Ho*Wo + p  ->  kernel rows g = p*C + c
        # (per-branch NHWC flatten emitted by the conv kernel).
        return (red_half.reshape(cenc, hw_prod, emb)
                .transpose(1, 0, 2)
                .reshape(hw_prod * cenc, emb)
                .astype(COMPUTE_DTYPE))

    return {
        "conv_w": jnp.stack((prep_conv_w(tp["enc_w"]), prep_conv_w(tp["menc_w"]))),
        "conv_b": jnp.stack((tp["enc_b"], tp["menc_b"])).reshape(2, 1, cenc),
        "w_red_img": prep_red(tp["red_w"][:half]),
        "w_red_msk": prep_red(tp["red_w"][half:]),
        "red_b": tp["red_b"].reshape(1, -1),
        "cls_w1": tp["cls_w1"], "cls_b1": tp["cls_b1"].reshape(1, -1),
        "cls_w2": tp["cls_w2"], "cls_b2": tp["cls_b2"].reshape(1, -1),
        "cls_w3": tp["cls_w3"], "cls_b3": tp["cls_b3"].reshape(1, -1),
    }


# ----------------------------------------------------------------------------
# Pure-JAX reference (f32, torch layout) for a numerical sanity check
# ----------------------------------------------------------------------------
def reference_forward(tp, image, masked_image):
    def conv_relu(x, w, b):
        y = jax.lax.conv_general_dilated(
            x, w, window_strides=(2, 2), padding=((1, 1), (1, 1)),
            dimension_numbers=("NCHW", "OIHW", "NCHW"))
        return jnp.maximum(y + b[None, :, None, None], 0.0)

    ei = conv_relu(image, tp["enc_w"], tp["enc_b"])
    em = conv_relu(masked_image, tp["menc_w"], tp["menc_b"])
    flat = jnp.concatenate((ei, em), axis=1).reshape(image.shape[0], -1)
    red = flat @ tp["red_w"] + tp["red_b"]
    h = jnp.maximum(red @ tp["cls_w1"] + tp["cls_b1"], 0.0)
    h = jnp.maximum(h @ tp["cls_w2"] + tp["cls_b2"], 0.0)
    return h @ tp["cls_w3"] + tp["cls_b3"]


if __name__ == "__main__":
    key = jax.random.PRNGKey(0)
    k_img, k_msk, k_par = jax.random.split(key, 3)

    B, C, H, W = 2, 3, 16, 16
    image = jax.random.normal(k_img, (B, C, H, W), jnp.float32)
    masked_image = jax.random.normal(k_msk, (B, C, H, W), jnp.float32)

    tparams = init_params(k_par, cin=C, cenc=8, hw=H, image_embedding=32, hidden=32)
    kparams = prepare_params(tparams)     # one-time layout folding (not in hot path)

    fwd = jax.jit(masked_coordinate_predictor_forward)
    coords = jax.block_until_ready(fwd(kparams, image, masked_image))

    assert coords.shape == (B, 2) and coords.dtype == jnp.float32

    # generous tolerance: bf16 MXU inputs with f32 accumulation
    ref = reference_forward(tparams, image, masked_image)
    assert jnp.allclose(coords, ref, atol=2e-2, rtol=2e-2)

    print("KERNEL_OK")
</pallas_src>

<mosaic_0001>
module attributes {stable_mosaic.version = 11 : i64} {
  func.func @_conv_branches_kernel(%arg0: i32, %arg1: i32, %arg2: memref<1x128x32xbf16, #tpu.memory_space<vmem>>, %arg3: memref<1x32x8xbf16, #tpu.memory_space<vmem>>, %arg4: memref<1x1x8xf32, #tpu.memory_space<vmem>>, %arg5: memref<1x128x8xf32, #tpu.memory_space<vmem>>) attributes {dimension_semantics = [#tpu.dimension_semantics<parallel>, #tpu.dimension_semantics<parallel>], iteration_bounds = array<i64: 2, 1>, scalar_prefetch = 0 : i64, scratch_operands = 0 : i64, tpu.core_type = #tpu.core_type<tc>, window_params = [{transform_indices = @transform_0, window_bounds = array<i64: 1, 128, 32>}, {transform_indices = @transform_1, window_bounds = array<i64: 1, 32, 8>}, {transform_indices = @transform_2, window_bounds = array<i64: 1, 1, 8>}, {transform_indices = @transform_3, window_bounds = array<i64: 1, 128, 8>}]} {
    %c0 = arith.constant 0 : index
    %c0_0 = arith.constant 0 : index
    %c0_1 = arith.constant 0 : index
    %0 = vector.load %arg2[%c0, %c0_0, %c0_1] : memref<1x128x32xbf16, #tpu.memory_space<vmem>>, vector<1x128x32xbf16>
    %1 = vector.shape_cast %0 : vector<1x128x32xbf16> to vector<128x32xbf16>
    %c0_2 = arith.constant 0 : index
    %c0_3 = arith.constant 0 : index
    %c0_4 = arith.constant 0 : index
    %2 = vector.load %arg3[%c0_2, %c0_3, %c0_4] : memref<1x32x8xbf16, #tpu.memory_space<vmem>>, vector<1x32x8xbf16>
    %3 = vector.shape_cast %2 : vector<1x32x8xbf16> to vector<32x8xbf16>
    %cst = arith.constant dense<0.000000e+00> : vector<128x8xf32>
    %4 = tpu.matmul %1, %3, %cst {dimension_numbers = #tpu.dot_dimension_numbers<[1], [0], [0], [1], [0, 0, 1, 1], [], []>} : vector<128x32xbf16>, vector<32x8xbf16>, vector<128x8xf32> -> vector<128x8xf32>
    %c0_5 = arith.constant 0 : index
    %c0_6 = arith.constant 0 : index
    %c0_7 = arith.constant 0 : index
    %5 = vector.load %arg4[%c0_5, %c0_6, %c0_7] : memref<1x1x8xf32, #tpu.memory_space<vmem>>, vector<1x1x8xf32>
    %6 = vector.shape_cast %5 : vector<1x1x8xf32> to vector<1x8xf32>
    %7 = vector.broadcast %6 : vector<1x8xf32> to vector<128x8xf32>
    %8 = arith.addf %4, %7 : vector<128x8xf32>
    %cst_8 = arith.constant 0.000000e+00 : f32
    %9 = vector.broadcast %cst_8 : f32 to vector<128x8xf32>
    %10 = arith.maximumf %8, %9 : vector<128x8xf32>
    %c0_9 = arith.constant 0 : index
    %c0_10 = arith.constant 0 : index
    %c0_11 = arith.constant 0 : index
    %11 = vector.load %arg5[%c0_9, %c0_10, %c0_11] : memref<1x128x8xf32, #tpu.memory_space<vmem>>, vector<1x128x8xf32>
    %12 = vector.shape_cast %11 : vector<1x128x8xf32> to vector<128x8xf32>
    %13 = vector.shape_cast %10 : vector<128x8xf32> to vector<1x128x8xf32>
    tpu.vector_store %arg5[%c0_9, %c0_10, %c0_11], %13 {strides = array<i32>} : memref<1x128x8xf32, #tpu.memory_space<vmem>>, vector<1x128x8xf32>,
    return
  }
  func.func @transform_0(%arg0: i32, %arg1: i32) -> (i32, i32, i32) {
    %c0_i32 = arith.constant 0 : i32
    %c0_i32_0 = arith.constant 0 : i32
    return %arg0, %arg1, %c0_i32 : i32, i32, i32
  }
  func.func @transform_1(%arg0: i32, %arg1: i32) -> (i32, i32, i32) {
    %c0_i32 = arith.constant 0 : i32
    %c0_i32_0 = arith.constant 0 : i32
    %c0_i32_1 = arith.constant 0 : i32
    return %arg0, %c0_i32, %c0_i32_0 : i32, i32, i32
  }
  func.func @transform_2(%arg0: i32, %arg1: i32) -> (i32, i32, i32) {
    %c0_i32 = arith.constant 0 : i32
    %c0_i32_0 = arith.constant 0 : i32
    %c0_i32_1 = arith.constant 0 : i32
    return %arg0, %c0_i32, %c0_i32_0 : i32, i32, i32
  }
  func.func @transform_3(%arg0: i32, %arg1: i32) -> (i32, i32, i32) {
    %c0_i32 = arith.constant 0 : i32
    %c0_i32_0 = arith.constant 0 : i32
    return %arg0, %arg1, %c0_i32 : i32, i32, i32
  }
}

module attributes {stable_mosaic.version = 11 : i64} {
  func.func @_fused_head_kernel(%arg0: i32, %arg1: memref<2x512xf32, #tpu.memory_space<vmem>>, %arg2: memref<2x512xf32, #tpu.memory_space<vmem>>, %arg3: memref<512x32xbf16, #tpu.memory_space<vmem>>, %arg4: memref<512x32xbf16, #tpu.memory_space<vmem>>, %arg5: memref<1x32xf32, #tpu.memory_space<vmem>>, %arg6: memref<32x32xf32, #tpu.memory_space<vmem>>, %arg7: memref<1x32xf32, #tpu.memory_space<vmem>>, %arg8: memref<32x32xf32, #tpu.memory_space<vmem>>, %arg9: memref<1x32xf32, #tpu.memory_space<vmem>>, %arg10: memref<32x2xf32, #tpu.memory_space<vmem>>, %arg11: memref<1x2xf32, #tpu.memory_space<vmem>>, %arg12: memref<2x2xf32, #tpu.memory_space<vmem>>) attributes {dimension_semantics = [#tpu.dimension_semantics<arbitrary>], iteration_bounds = array<i64: 1>, scalar_prefetch = 0 : i64, scratch_operands = 0 : i64, tpu.core_type = #tpu.core_type<tc>, window_params = [{pipeline_mode = #tpu.pipeline_mode<synchronous>, transform_indices = @transform_0, window_bounds = array<i64: 2, 512>}, {pipeline_mode = #tpu.pipeline_mode<synchronous>, transform_indices = @transform_1, window_bounds = array<i64: 2, 512>}, {pipeline_mode = #tpu.pipeline_mode<synchronous>, transform_indices = @transform_2, window_bounds = array<i64: 512, 32>}, {pipeline_mode = #tpu.pipeline_mode<synchronous>, transform_indices = @transform_3, window_bounds = array<i64: 512, 32>}, {pipeline_mode = #tpu.pipeline_mode<synchronous>, transform_indices = @transform_4, window_bounds = array<i64: 1, 32>}, {pipeline_mode = #tpu.pipeline_mode<synchronous>, transform_indices = @transform_5, window_bounds = array<i64: 32, 32>}, {pipeline_mode = #tpu.pipeline_mode<synchronous>, transform_indices = @transform_6, window_bounds = array<i64: 1, 32>}, {pipeline_mode = #tpu.pipeline_mode<synchronous>, transform_indices = @transform_7, window_bounds = array<i64: 32, 32>}, {pipeline_mode = #tpu.pipeline_mode<synchronous>, transform_indices = @transform_8, window_bounds = array<i64: 1, 32>}, {pipeline_mode = #tpu.pipeline_mode<synchronous>, transform_indices = @transform_9, window_bounds = array<i64: 32, 2>}, {pipeline_mode = #tpu.pipeline_mode<synchronous>, transform_indices = @transform_10, window_bounds = array<i64: 1, 2>}, {pipeline_mode = #tpu.pipeline_mode<synchronous>, transform_indices = @transform_11, window_bounds = array<i64: 2, 2>}]} {
    %c0 = arith.constant 0 : index
    %c0_0 = arith.constant 0 : index
    %0 = vector.load %arg1[%c0, %c0_0] : memref<2x512xf32, #tpu.memory_space<vmem>>, vector<2x512xf32>
    %1 = arith.truncf %0 : vector<2x512xf32> to vector<2x512xbf16>
    %c0_1 = arith.constant 0 : index
    %c0_2 = arith.constant 0 : index
    %2 = vector.load %arg2[%c0_1, %c0_2] : memref<2x512xf32, #tpu.memory_space<vmem>>, vector<2x512xf32>
    %3 = arith.truncf %2 : vector<2x512xf32> to vector<2x512xbf16>
    %c0_3 = arith.constant 0 : index
    %c0_4 = arith.constant 0 : index
    %4 = vector.load %arg3[%c0_3, %c0_4] : memref<512x32xbf16, #tpu.memory_space<vmem>>, vector<512x32xbf16>
    %cst = arith.constant dense<0.000000e+00> : vector<2x32xf32>
    %5 = tpu.matmul %1, %4, %cst {dimension_numbers = #tpu.dot_dimension_numbers<[1], [0], [0], [1], [0, 0, 1, 1], [], []>} : vector<2x512xbf16>, vector<512x32xbf16>, vector<2x32xf32> -> vector<2x32xf32>
    %c0_5 = arith.constant 0 : index
    %c0_6 = arith.constant 0 : index
    %6 = vector.load %arg4[%c0_5, %c0_6] : memref<512x32xbf16, #tpu.memory_space<vmem>>, vector<512x32xbf16>
    %cst_7 = arith.constant dense<0.000000e+00> : vector<2x32xf32>
    %7 = tpu.matmul %3, %6, %cst_7 {dimension_numbers = #tpu.dot_dimension_numbers<[1], [0], [0], [1], [0, 0, 1, 1], [], []>} : vector<2x512xbf16>, vector<512x32xbf16>, vector<2x32xf32> -> vector<2x32xf32>
    %8 = arith.addf %5, %7 : vector<2x32xf32>
    %c0_8 = arith.constant 0 : index
    %c0_9 = arith.constant 0 : index
    %9 = vector.load %arg5[%c0_8, %c0_9] : memref<1x32xf32, #tpu.memory_space<vmem>>, vector<1x32xf32>
    %10 = vector.broadcast %9 : vector<1x32xf32> to vector<2x32xf32>
    %11 = arith.addf %8, %10 : vector<2x32xf32>
    %c0_10 = arith.constant 0 : index
    %c0_11 = arith.constant 0 : index
    %12 = vector.load %arg6[%c0_10, %c0_11] : memref<32x32xf32, #tpu.memory_space<vmem>>, vector<32x32xf32>
    %cst_12 = arith.constant dense<0.000000e+00> : vector<2x32xf32>
    %13 = tpu.matmul %11, %12, %cst_12 {dimension_numbers = #tpu.dot_dimension_numbers<[1], [0], [0], [1], [0, 0, 1, 1], [], []>} : vector<2x32xf32>, vector<32x32xf32>, vector<2x32xf32> -> vector<2x32xf32>
    %c0_13 = arith.constant 0 : index
    %c0_14 = arith.constant 0 : index
    %14 = vector.load %arg7[%c0_13, %c0_14] : memref<1x32xf32, #tpu.memory_space<vmem>>, vector<1x32xf32>
    %15 = vector.broadcast %14 : vector<1x32xf32> to vector<2x32xf32>
    %16 = arith.addf %13, %15 : vector<2x32xf32>
    %cst_15 = arith.constant 0.000000e+00 : f32
    %17 = vector.broadcast %cst_15 : f32 to vector<2x32xf32>
    %18 = arith.maximumf %16, %17 : vector<2x32xf32>
    %c0_16 = arith.constant 0 : index
    %c0_17 = arith.constant 0 : index
    %19 = vector.load %arg8[%c0_16, %c0_17] : memref<32x32xf32, #tpu.memory_space<vmem>>, vector<32x32xf32>
    %cst_18 = arith.constant dense<0.000000e+00> : vector<2x32xf32>
    %20 = tpu.matmul %18, %19, %cst_18 {dimension_numbers = #tpu.dot_dimension_numbers<[1], [0], [0], [1], [0, 0, 1, 1], [], []>} : vector<2x32xf32>, vector<32x32xf32>, vector<2x32xf32> -> vector<2x32xf32>
    %c0_19 = arith.constant 0 : index
    %c0_20 = arith.constant 0 : index
    %21 = vector.load %arg9[%c0_19, %c0_20] : memref<1x32xf32, #tpu.memory_space<vmem>>, vector<1x32xf32>
    %22 = vector.broadcast %21 : vector<1x32xf32> to vector<2x32xf32>
    %23 = arith.addf %20, %22 : vector<2x32xf32>
    %cst_21 = arith.constant 0.000000e+00 : f32
    %24 = vector.broadcast %cst_21 : f32 to vector<2x32xf32>
    %25 = arith.maximumf %23, %24 : vector<2x32xf32>
    %c0_22 = arith.constant 0 : index
    %c0_23 = arith.constant 0 : index
    %26 = vector.load %arg10[%c0_22, %c0_23] : memref<32x2xf32, #tpu.memory_space<vmem>>, vector<32x2xf32>
    %cst_24 = arith.constant dense<0.000000e+00> : vector<2x2xf32>
    %27 = tpu.matmul %25, %26, %cst_24 {dimension_numbers = #tpu.dot_dimension_numbers<[1], [0], [0], [1], [0, 0, 1, 1], [], []>} : vector<2x32xf32>, vector<32x2xf32>, vector<2x2xf32> -> vector<2x2xf32>
    %c0_25 = arith.constant 0 : index
    %c0_26 = arith.constant 0 : index
    %28 = vector.load %arg11[%c0_25, %c0_26] : memref<1x2xf32, #tpu.memory_space<vmem>>, vector<1x2xf32>
    %29 = vector.broadcast %28 : vector<1x2xf32> to vector<2x2xf32>
    %30 = arith.addf %27, %29 : vector<2x2xf32>
    %c0_27 = arith.constant 0 : index
    %c0_28 = arith.constant 0 : index
    %31 = vector.load %arg12[%c0_27, %c0_28] : memref<2x2xf32, #tpu.memory_space<vmem>>, vector<2x2xf32>
    tpu.vector_store %arg12[%c0_27, %c0_28], %30 {strides = array<i32>} : memref<2x2xf32, #tpu.memory_space<vmem>>, vector<2x2xf32>,
    return
  }
  func.func @transform_0(%arg0: i32) -> (i32, i32) {
    %c0_i32 = arith.constant 0 : i32
    %c0_i32_0 = arith.constant 0 : i32
    %c0_i32_1 = arith.constant 0 : i32
    return %c0_i32, %c0_i32_0 : i32, i32
  }
  func.func @transform_1(%arg0: i32) -> (i32, i32) {
    %c0_i32 = arith.constant 0 : i32
    %c0_i32_0 = arith.constant 0 : i32
    %c0_i32_1 = arith.constant 0 : i32
    return %c0_i32, %c0_i32_0 : i32, i32
  }
  func.func @transform_2(%arg0: i32) -> (i32, i32) {
    %c0_i32 = arith.constant 0 : i32
    %c0_i32_0 = arith.constant 0 : i32
    %c0_i32_1 = arith.constant 0 : i32
    return %c0_i32, %c0_i32_0 : i32, i32
  }
  func.func @transform_3(%arg0: i32) -> (i32, i32) {
    %c0_i32 = arith.constant 0 : i32
    %c0_i32_0 = arith.constant 0 : i32
    %c0_i32_1 = arith.constant 0 : i32
    return %c0_i32, %c0_i32_0 : i32, i32
  }
  func.func @transform_4(%arg0: i32) -> (i32, i32) {
    %c0_i32 = arith.constant 0 : i32
    %c0_i32_0 = arith.constant 0 : i32
    %c0_i32_1 = arith.constant 0 : i32
    return %c0_i32, %c0_i32_0 : i32, i32
  }
  func.func @transform_5(%arg0: i32) -> (i32, i32) {
    %c0_i32 = arith.constant 0 : i32
    %c0_i32_0 = arith.constant 0 : i32
    %c0_i32_1 = arith.constant 0 : i32
    return %c0_i32, %c0_i32_0 : i32, i32
  }
  func.func @transform_6(%arg0: i32) -> (i32, i32) {
    %c0_i32 = arith.constant 0 : i32
    %c0_i32_0 = arith.constant 0 : i32
    %c0_i32_1 = arith.constant 0 : i32
    return %c0_i32, %c0_i32_0 : i32, i32
  }
  func.func @transform_7(%arg0: i32) -> (i32, i32) {
    %c0_i32 = arith.constant 0 : i32
    %c0_i32_0 = arith.constant 0 : i32
    %c0_i32_1 = arith.constant 0 : i32
    return %c0_i32, %c0_i32_0 : i32, i32
  }
  func.func @transform_8(%arg0: i32) -> (i32, i32) {
    %c0_i32 = arith.constant 0 : i32
    %c0_i32_0 = arith.constant 0 : i32
    %c0_i32_1 = arith.constant 0 : i32
    return %c0_i32, %c0_i32_0 : i32, i32
  }
  func.func @transform_9(%arg0: i32) -> (i32, i32) {
    %c0_i32 = arith.constant 0 : i32
    %c0_i32_0 = arith.constant 0 : i32
    %c0_i32_1 = arith.constant 0 : i32
    return %c0_i32, %c0_i32_0 : i32, i32
  }
  func.func @transform_10(%arg0: i32) -> (i32, i32) {
    %c0_i32 = arith.constant 0 : i32
    %c0_i32_0 = arith.constant 0 : i32
    %c0_i32_1 = arith.constant 0 : i32
    return %c0_i32, %c0_i32_0 : i32, i32
  }
  func.func @transform_11(%arg0: i32) -> (i32, i32) {
    %c0_i32 = arith.constant 0 : i32
    %c0_i32_0 = arith.constant 0 : i32
    %c0_i32_1 = arith.constant 0 : i32
    return %c0_i32, %c0_i32_0 : i32, i32
  }
}

</mosaic_0001>

<llo_original>
// kernel: squeeze.2
$region0: #{squeeze.2}
  %s0 = inlined_call_operand.vmem [shape: f32[1,128,8], index: 0, kind: input, shape index: {}]
  %s1 = inlined_call_operand.vmem [shape: f32[2,512], index: 1, kind: output, shape index: {}]
  $region1: #{squeeze.2} parent=0
    #allocation0 [shape = 'u8[16384]{0}', space=vmem, size = 0x4000, scoped, tag = 'scoped mem for output reshape']
    %s2 = smov 3
    %v3 = vld [vmem:[%s0] ss:$16 sm:%s2]
    %s4 = smov 12
    %v5 = vld [vmem:[%s0] ss:$16 sm:%s4]
    %vm6 = vcmask 1043458
    %v7 = vsel %vm6, %v5, %v3
    %s8 = smov 48
    %v9 = vld [vmem:[%s0] ss:$16 sm:%s8]
    %vm10 = vcmask 1045508
    %v11 = vsel %vm10, %v9, %v7
    %s12 = smov 192
    %v13 = vld [vmem:[%s0] ss:$16 sm:%s12]
    %vm14 = vcmask 1047558
    %v15 = vsel %vm14, %v13, %v11
    %vm16 = vcmask 64512
    %17 = vst.msk [vmem:[#allocation0] ss:$8 sm:$0xf] %vm16, %v15
    %s18 = scalar_lea.vmem [#allocation0], 4294967265
    %19 = vst.msk [vmem:[%s18] ss:$8 sm:$0xf0] %vm16, %v15
    %s20 = scalar_lea.vmem %s0, 15
    %v21 = vld [vmem:[%s20] sm:$0x1]
    %s22 = scalar_lea.vmem %s0, 127
    %s23 = smov 6
    %v24 = vld [vmem:[%s22] ss:$-48 sm:%s23]
    %vm25 = vcmask 1042433
    %v26 = vsel %vm25, %v24, %v21
    %s27 = scalar_lea.vmem %s0, 239
    %s28 = smov 24
    %v29 = vld [vmem:[%s27] ss:$-48 sm:%s28]
    %vm30 = vcmask 1044483
    %v31 = vsel %vm30, %v29, %v26
    %s32 = scalar_lea.vmem %s0, 351
    %s33 = smov 96
    %v34 = vld [vmem:[%s32] ss:$-48 sm:%s33]
    %vm35 = vcmask 1046533
    %v36 = vsel %vm35, %v34, %v31
    %s37 = scalar_lea.vmem %s0, 120
    %v38 = vld [vmem:[%s37] sm:$0x80]
    %vm39 = vcmask 1047559
    %v40 = vsel %vm39, %v38, %v36
    %41 = vrot.lane.b32.xlu0 %v40, 120
    %v42 = vpop.permute.xlu0 %41
    %vm43 = vcmask 1048512
    %44 = vst.msk [vmem:[#allocation0] sm:$0x3] %vm43, %v42
    %s45 = scalar_lea.vmem [#allocation0], 6
    %46 = vst.msk [vmem:[%s45] sm:$0xc] %vm43, %v42
    %s47 = scalar_lea.vmem [#allocation0], 12
    %48 = vst.msk [vmem:[%s47] sm:$0x30] %vm43, %v42
    %s49 = scalar_lea.vmem [#allocation0], 18
    %50 = vst.msk [vmem:[%s49] sm:$0xc0] %vm43, %v42
    %s51 = scalar_lea.vmem %s0, 14
    %v52 = vld [vmem:[%s51] sm:$0x1]
    %s53 = scalar_lea.vmem %s0, 126
    %s54 = smov 6
    %v55 = vld [vmem:[%s53] ss:$-48 sm:%s54]
    %vm56 = vcmask 1042433
    %v57 = vsel %vm56, %v55, %v52
    %s58 = scalar_lea.vmem %s0, 238
    %s59 = smov 24
    %v60 = vld [vmem:[%s58] ss:$-48 sm:%s59]
    %vm61 = vcmask 1044483
    %v62 = vsel %vm61, %v60, %v57
    %s63 = scalar_lea.vmem %s0, 350
    %s64 = smov 96
    %v65 = vld [vmem:[%s63] ss:$-48 sm:%s64]
    %vm66 = vcmask 1046533
    %v67 = vsel %vm66, %v65, %v62
    %s68 = scalar_lea.vmem %s0, 119
    %v69 = vld [vmem:[%s68] sm:$0x80]
    %vm70 = vcmask 1047559
    %v71 = vsel %vm70, %v69, %v67
    %72 = vrot.lane.b32.xlu0 %v71, 112
    %v73 = vpop.permute.xlu0 %72
    %vm74 = vcmask 982912
    %75 = vst.msk [vmem:[#allocation0] sm:$0x3] %vm74, %v73
    %s76 = scalar_lea.vmem [#allocation0], 6
    %77 = vst.msk [vmem:[%s76] sm:$0xc] %vm74, %v73
    %s78 = scalar_lea.vmem [#allocation0], 12
    %79 = vst.msk [vmem:[%s78] sm:$0x30] %vm74, %v73
    %s80 = scalar_lea.vmem [#allocation0], 18
    %81 = vst.msk [vmem:[%s80] sm:$0xc0] %vm74, %v73
    %s82 = scalar_lea.vmem %s0, 13
    %v83 = vld [vmem:[%s82] sm:$0x1]
    %s84 = scalar_lea.vmem %s0, 125
    %s85 = smov 6
    %v86 = vld [vmem:[%s84] ss:$-48 sm:%s85]
    %vm87 = vcmask 1042433
    %v88 = vsel %vm87, %v86, %v83
    %s89 = scalar_lea.vmem %s0, 237
    %s90 = smov 24
    %v91 = vld [vmem:[%s89] ss:$-48 sm:%s90]
    %vm92 = vcmask 1044483
    %v93 = vsel %vm92, %v91, %v88
    %s94 = scalar_lea.vmem %s0, 349
    %s95 = smov 96
    %v96 = vld [vmem:[%s94] ss:$-48 sm:%s95]
    %vm97 = vcmask 1046533
    %v98 = vsel %vm97, %v96, %v93
    %s99 = scalar_lea.vmem %s0, 118
    %v100 = vld [vmem:[%s99] sm:$0x80]
    %vm101 = vcmask 1047559
    %v102 = vsel %vm101, %v100, %v98
    %103 = vrot.lane.b32.xlu0 %v102, 104
    %v104 = vpop.permute.xlu0 %103
    %vm105 = vcmask 917312
    %106 = vst.msk [vmem:[#allocation0] sm:$0x3] %vm105, %v104
    %s107 = scalar_lea.vmem [#allocation0], 6
    %108 = vst.msk [vmem:[%s107] sm:$0xc] %vm105, %v104
    %s109 = scalar_lea.vmem [#allocation0], 12
    %110 = vst.msk [vmem:[%s109] sm:$0x30] %vm105, %v104
    %s111 = scalar_lea.vmem [#allocation0], 18
    %112 = vst.msk [vmem:[%s111] sm:$0xc0] %vm105, %v104
    %s113 = scalar_lea.vmem %s0, 12
    %v114 = vld [vmem:[%s113] sm:$0x1]
    %s115 = scalar_lea.vmem %s0, 124
    %s116 = smov 6
    %v117 = vld [vmem:[%s115] ss:$-48 sm:%s116]
    %vm118 = vcmask 1042433
    %v119 = vsel %vm118, %v117, %v114
    %s120 = scalar_lea.vmem %s0, 236
    %s121 = smov 24
    %v122 = vld [vmem:[%s120] ss:$-48 sm:%s121]
    %vm123 = vcmask 1044483
    %v124 = vsel %vm123, %v122, %v119
    %s125 = scalar_lea.vmem %s0, 348
    %s126 = smov 96
    %v127 = vld [vmem:[%s125] ss:$-48 sm:%s126]
    %vm128 = vcmask 1046533
    %v129 = vsel %vm128, %v127, %v124
    %s130 = scalar_lea.vmem %s0, 117
    %v131 = vld [vmem:[%s130] sm:$0x80]
    %vm132 = vcmask 1047559
    %v133 = vsel %vm132, %v131, %v129
    %134 = vrot.lane.b32.xlu0 %v133, 96
    %v135 = vpop.permute.xlu0 %134
    %vm136 = vcmask 851712
    %137 = vst.msk [vmem:[#allocation0] sm:$0x3] %vm136, %v135
    %s138 = scalar_lea.vmem [#allocation0], 6
    %139 = vst.msk [vmem:[%s138] sm:$0xc] %vm136, %v135
    %s140 = scalar_lea.vmem [#allocation0], 12
    %141 = vst.msk [vmem:[%s140] sm:$0x30] %vm136, %v135
    %s142 = scalar_lea.vmem [#allocation0], 18
    %143 = vst.msk [vmem:[%s142] sm:$0xc0] %vm136, %v135
    %s144 = scalar_lea.vmem %s0, 11
    %v145 = vld [vmem:[%s144] sm:$0x1]
    %s146 = scalar_lea.vmem %s0, 123
    %s147 = smov 6
    %v148 = vld [vmem:[%s146] ss:$-48 sm:%s147]
    %vm149 = vcmask 1042433
    %v150 = vsel %vm149, %v148, %v145
    %s151 = scalar_lea.vmem %s0, 235
    %s152 = smov 24
    %v153 = vld [vmem:[%s151] ss:$-48 sm:%s152]
    %vm154 = vcmask 1044483
    %v155 = vsel %vm154, %v153, %v150
    %s156 = scalar_lea.vmem %s0, 347
    %s157 = smov 96
    %v158 = vld [vmem:[%s156] ss:$-48 sm:%s157]
    %vm159 = vcmask 1046533
    %v160 = vsel %vm159, %v158, %v155
    %s161 = scalar_lea.vmem %s0, 116
    %v162 = vld [vmem:[%s161] sm:$0x80]
    %vm163 = vcmask 1047559
    %v164 = vsel %vm163, %v162, %v160
    %165 = vrot.lane.b32.xlu0 %v164, 88
    %v166 = vpop.permute.xlu0 %165
    %vm167 = vcmask 786112
    %168 = vst.msk [vmem:[#allocation0] sm:$0x3] %vm167, %v166
    %s169 = scalar_lea.vmem [#allocation0], 6
    %170 = vst.msk [vmem:[%s169] sm:$0xc] %vm167, %v166
    %s171 = scalar_lea.vmem [#allocation0], 12
    %172 = vst.msk [vmem:[%s171] sm:$0x30] %vm167, %v166
    %s173 = scalar_lea.vmem [#allocation0], 18
    %174 = vst.msk [vmem:[%s173] sm:$0xc0] %vm167, %v166
    %s175 = scalar_lea.vmem %s0, 10
    %v176 = vld [vmem:[%s175] sm:$0x1]
    %s177 = scalar_lea.vmem %s0, 122
    %s178 = smov 6
    %v179 = vld [vmem:[%s177] ss:$-48 sm:%s178]
    %vm180 = vcmask 1042433
    %v181 = vsel %vm180, %v179, %v176
    %s182 = scalar_lea.vmem %s0, 234
    %s183 = smov 24
    %v184 = vld [vmem:[%s182] ss:$-48 sm:%s183]
    %vm185 = vcmask 1044483
    %v186 = vsel %vm185, %v184, %v181
    %s187 = scalar_lea.vmem %s0, 346
    %s188 = smov 96
    %v189 = vld [vmem:[%s187] ss:$-48 sm:%s188]
    %vm190 = vcmask 1046533
    %v191 = vsel %vm190, %v189, %v186
    %s192 = scalar_lea.vmem %s0, 115
    %v193 = vld [vmem:[%s192] sm:$0x80]
    %vm194 = vcmask 1047559
    %v195 = vsel %vm194, %v193, %v191
    %196 = vrot.lane.b32.xlu0 %v195, 80
    %v197 = vpop.permute.xlu0 %196
    %vm198 = vcmask 720512
    %199 = vst.msk [vmem:[#allocation0] sm:$0x3] %vm198, %v197
    %s200 = scalar_lea.vmem [#allocation0], 6
    %201 = vst.msk [vmem:[%s200] sm:$0xc] %vm198, %v197
    %s202 = scalar_lea.vmem [#allocation0], 12
    %203 = vst.msk [vmem:[%s202] sm:$0x30] %vm198, %v197
    %s204 = scalar_lea.vmem [#allocation0], 18
    %205 = vst.msk [vmem:[%s204] sm:$0xc0] %vm198, %v197
    %s206 = scalar_lea.vmem %s0, 9
    %v207 = vld [vmem:[%s206] sm:$0x1]
    %s208 = scalar_lea.vmem %s0, 121
    %s209 = smov 6
    %v210 = vld [vmem:[%s208] ss:$-48 sm:%s209]
    %vm211 = vcmask 1042433
    %v212 = vsel %vm211, %v210, %v207
    %s213 = scalar_lea.vmem %s0, 233
    %s214 = smov 24
    %v215 = vld [vmem:[%s213] ss:$-48 sm:%s214]
    %vm216 = vcmask 1044483
    %v217 = vsel %vm216, %v215, %v212
    %s218 = scalar_lea.vmem %s0, 345
    %s219 = smov 96
    %v220 = vld [vmem:[%s218] ss:$-48 sm:%s219]
    %vm221 = vcmask 1046533
    %v222 = vsel %vm221, %v220, %v217
    %s223 = scalar_lea.vmem %s0, 114
    %v224 = vld [vmem:[%s223] sm:$0x80]
    %vm225 = vcmask 1047559
    %v226 = vsel %vm225, %v224, %v222
    %227 = vrot.lane.b32.xlu0 %v226, 72
    %v228 = vpop.permute.xlu0 %227
    %vm229 = vcmask 654912
    %230 = vst.msk [vmem:[#allocation0] sm:$0x3] %vm229, %v228
    %s231 = scalar_lea.vmem [#allocation0], 6
    %232 = vst.msk [vmem:[%s231] sm:$0xc] %vm229, %v228
    %s233 = scalar_lea.vmem [#allocation0], 12
    %234 = vst.msk [vmem:[%s233] sm:$0x30] %vm229, %v228
    %s235 = scalar_lea.vmem [#allocation0], 18
    %236 = vst.msk [vmem:[%s235] sm:$0xc0] %vm229, %v228
    %s237 = scalar_lea.vmem %s0, 8
    %v238 = vld [vmem:[%s237] sm:$0x1]
    %s239 = scalar_lea.vmem %s0, 120
    %s240 = smov 6
    %v241 = vld [vmem:[%s239] ss:$-48 sm:%s240]
    %vm242 = vcmask 1042433
    %v243 = vsel %vm242, %v241, %v238
    %s244 = scalar_lea.vmem %s0, 232
    %s245 = smov 24
    %v246 = vld [vmem:[%s244] ss:$-48 sm:%s245]
    %vm247 = vcmask 1044483
    %v248 = vsel %vm247, %v246, %v243
    %s249 = scalar_lea.vmem %s0, 344
    %s250 = smov 96
    %v251 = vld [vmem:[%s249] ss:$-48 sm:%s250]
    %vm252 = vcmask 1046533
    %v253 = vsel %vm252, %v251, %v248
    %s254 = scalar_lea.vmem %s0, 113
    %v255 = vld [vmem:[%s254] sm:$0x80]
    %vm256 = vcmask 1047559
    %v257 = vsel %vm256, %v255, %v253
    %258 = vrot.lane.b32.xlu0 %v257, 64
    %v259 = vpop.permute.xlu0 %258
    %vm260 = vcmask 589312
    %261 = vst.msk [vmem:[#allocation0] sm:$0x3] %vm260, %v259
    %s262 = scalar_lea.vmem [#allocation0], 6
    %263 = vst.msk [vmem:[%s262] sm:$0xc] %vm260, %v259
    %s264 = scalar_lea.vmem [#allocation0], 12
    %265 = vst.msk [vmem:[%s264] sm:$0x30] %vm260, %v259
    %s266 = scalar_lea.vmem [#allocation0], 18
    %267 = vst.msk [vmem:[%s266] sm:$0xc0] %vm260, %v259
    %s268 = scalar_lea.vmem %s0, 7
    %v269 = vld [vmem:[%s268] sm:$0x1]
    %s270 = scalar_lea.vmem %s0, 119
    %s271 = smov 6
    %v272 = vld [vmem:[%s270] ss:$-48 sm:%s271]
    %vm273 = vcmask 1042433
    %v274 = vsel %vm273, %v272, %v269
    %s275 = scalar_lea.vmem %s0, 231
    %s276 = smov 24
    %v277 = vld [vmem:[%s275] ss:$-48 sm:%s276]
    %vm278 = vcmask 1044483
    %v279 = vsel %vm278, %v277, %v274
    %s280 = scalar_lea.vmem %s0, 343
    %s281 = smov 96
    %v282 = vld [vmem:[%s280] ss:$-48 sm:%s281]
    %vm283 = vcmask 1046533
    %v284 = vsel %vm283, %v282, %v279
    %s285 = scalar_lea.vmem %s0, 112
    %v286 = vld [vmem:[%s285] sm:$0x80]
    %vm287 = vcmask 1047559
    %v288 = vsel %vm287, %v286, %v284
    %289 = vrot.lane.b32.xlu0 %v288, 56
    %v290 = vpop.permute.xlu0 %289
    %vm291 = vcmask 523712
    %292 = vst.msk [vmem:[#allocation0] sm:$0x3] %vm291, %v290
    %s293 = scalar_lea.vmem [#allocation0], 6
    %294 = vst.msk [vmem:[%s293] sm:$0xc] %vm291, %v290
    %s295 = scalar_lea.vmem [#allocation0], 12
    %296 = vst.msk [vmem:[%s295] sm:$0x30] %vm291, %v290
    %s297 = scalar_lea.vmem [#allocation0], 18
    %298 = vst.msk [vmem:[%s297] sm:$0xc0] %vm291, %v290
    %s299 = scalar_lea.vmem %s0, 6
    %v300 = vld [vmem:[%s299] sm:$0x1]
    %s301 = scalar_lea.vmem %s0, 118
    %s302 = smov 6
    %v303 = vld [vmem:[%s301] ss:$-48 sm:%s302]
    %vm304 = vcmask 1042433
    %v305 = vsel %vm304, %v303, %v300
    %s306 = scalar_lea.vmem %s0, 230
    %s307 = smov 24
    %v308 = vld [vmem:[%s306] ss:$-48 sm:%s307]
    %vm309 = vcmask 1044483
    %v310 = vsel %vm309, %v308, %v305
    %s311 = scalar_lea.vmem %s0, 342
    %s312 = smov 96
    %v313 = vld [vmem:[%s311] ss:$-48 sm:%s312]
    %vm314 = vcmask 1046533
    %v315 = vsel %vm314, %v313, %v310
    %s316 = scalar_lea.vmem %s0, 111
    %v317 = vld [vmem:[%s316] sm:$0x80]
    %vm318 = vcmask 1047559
    %v319 = vsel %vm318, %v317, %v315
    %320 = vrot.lane.b32.xlu0 %v319, 48
    %v321 = vpop.permute.xlu0 %320
    %vm322 = vcmask 458112
    %323 = vst.msk [vmem:[#allocation0] sm:$0x3] %vm322, %v321
    %s324 = scalar_lea.vmem [#allocation0], 6
    %325 = vst.msk [vmem:[%s324] sm:$0xc] %vm322, %v321
    %s326 = scalar_lea.vmem [#allocation0], 12
    %327 = vst.msk [vmem:[%s326] sm:$0x30] %vm322, %v321
    %s328 = scalar_lea.vmem [#allocation0], 18
    %329 = vst.msk [vmem:[%s328] sm:$0xc0] %vm322, %v321
    %s330 = scalar_lea.vmem %s0, 5
    %v331 = vld [vmem:[%s330] sm:$0x1]
    %s332 = scalar_lea.vmem %s0, 117
    %s333 = smov 6
    %v334 = vld [vmem:[%s332] ss:$-48 sm:%s333]
    %vm335 = vcmask 1042433
    %v336 = vsel %vm335, %v334, %v331
    %s337 = scalar_lea.vmem %s0, 229
    %s338 = smov 24
    %v339 = vld [vmem:[%s337] ss:$-48 sm:%s338]
    %vm340 = vcmask 1044483
    %v341 = vsel %vm340, %v339, %v336
    %s342 = scalar_lea.vmem %s0, 341
    %s343 = smov 96
    %v344 = vld [vmem:[%s342] ss:$-48 sm:%s343]
    %vm345 = vcmask 1046533
    %v346 = vsel %vm345, %v344, %v341
    %s347 = scalar_lea.vmem %s0, 110
    %v348 = vld [vmem:[%s347] sm:$0x80]
    %vm349 = vcmask 1047559
    %v350 = vsel %vm349, %v348, %v346
    %351 = vrot.lane.b32.xlu0 %v350, 40
    %v352 = vpop.permute.xlu0 %351
    %vm353 = vcmask 392512
    %354 = vst.msk [vmem:[#allocation0] sm:$0x3] %vm353, %v352
    %s355 = scalar_lea.vmem [#allocation0], 6
    %356 = vst.msk [vmem:[%s355] sm:$0xc] %vm353, %v352
    %s357 = scalar_lea.vmem [#allocation0], 12
    %358 = vst.msk [vmem:[%s357] sm:$0x30] %vm353, %v352
    %s359 = scalar_lea.vmem [#allocation0], 18
    %360 = vst.msk [vmem:[%s359] sm:$0xc0] %vm353, %v352
    %s361 = scalar_lea.vmem %s0, 4
    %v362 = vld [vmem:[%s361] sm:$0x1]
    %s363 = scalar_lea.vmem %s0, 116
    %s364 = smov 6
    %v365 = vld [vmem:[%s363] ss:$-48 sm:%s364]
    %vm366 = vcmask 1042433
    %v367 = vsel %vm366, %v365, %v362
    %s368 = scalar_lea.vmem %s0, 228
    %s369 = smov 24
    %v370 = vld [vmem:[%s368] ss:$-48 sm:%s369]
    %vm371 = vcmask 1044483
    %v372 = vsel %vm371, %v370, %v367
    %s373 = scalar_lea.vmem %s0, 340
    %s374 = smov 96
    %v375 = vld [vmem:[%s373] ss:$-48 sm:%s374]
    %vm376 = vcmask 1046533
    %v377 = vsel %vm376, %v375, %v372
    %s378 = scalar_lea.vmem %s0, 109
    %v379 = vld [vmem:[%s378] sm:$0x80]
    %vm380 = vcmask 1047559
    %v381 = vsel %vm380, %v379, %v377
    %382 = vrot.lane.b32.xlu0 %v381, 32
    %v383 = vpop.permute.xlu0 %382
    %vm384 = vcmask 326912
    %385 = vst.msk [vmem:[#allocation0] sm:$0x3] %vm384, %v383
    %s386 = scalar_lea.vmem [#allocation0], 6
    %387 = vst.msk [vmem:[%s386] sm:$0xc] %vm384, %v383
    %s388 = scalar_lea.vmem [#allocation0], 12
    %389 = vst.msk [vmem:[%s388] sm:$0x30] %vm384, %v383
    %s390 = scalar_lea.vmem [#allocation0], 18
    %391 = vst.msk [vmem:[%s390] sm:$0xc0] %vm384, %v383
    %s392 = scalar_lea.vmem %s0, 3
    %v393 = vld [vmem:[%s392] sm:$0x1]
    %s394 = scalar_lea.vmem %s0, 115
    %s395 = smov 6
    %v396 = vld [vmem:[%s394] ss:$-48 sm:%s395]
    %vm397 = vcmask 1042433
    %v398 = vsel %vm397, %v396, %v393
    %s399 = scalar_lea.vmem %s0, 227
    %s400 = smov 24
    %v401 = vld [vmem:[%s399] ss:$-48 sm:%s400]
    %vm402 = vcmask 1044483
    %v403 = vsel %vm402, %v401, %v398
    %s404 = scalar_lea.vmem %s0, 339
    %s405 = smov 96
    %v406 = vld [vmem:[%s404] ss:$-48 sm:%s405]
    %vm407 = vcmask 1046533
    %v408 = vsel %vm407, %v406, %v403
    %s409 = scalar_lea.vmem %s0, 108
    %v410 = vld [vmem:[%s409] sm:$0x80]
    %vm411 = vcmask 1047559
    %v412 = vsel %vm411, %v410, %v408
    %413 = vrot.lane.b32.xlu0 %v412, 24
    %v414 = vpop.permute.xlu0 %413
    %vm415 = vcmask 261312
    %416 = vst.msk [vmem:[#allocation0] sm:$0x3] %vm415, %v414
    %s417 = scalar_lea.vmem [#allocation0], 6
    %418 = vst.msk [vmem:[%s417] sm:$0xc] %vm415, %v414
    %s419 = scalar_lea.vmem [#allocation0], 12
    %420 = vst.msk [vmem:[%s419] sm:$0x30] %vm415, %v414
    %s421 = scalar_lea.vmem [#allocation0], 18
    %422 = vst.msk [vmem:[%s421] sm:$0xc0] %vm415, %v414
    %s423 = scalar_lea.vmem %s0, 2
    %v424 = vld [vmem:[%s423] sm:$0x1]
    %s425 = scalar_lea.vmem %s0, 114
    %s426 = smov 6
    %v427 = vld [vmem:[%s425] ss:$-48 sm:%s426]
    %vm428 = vcmask 1042433
    %v429 = vsel %vm428, %v427, %v424
    %s430 = scalar_lea.vmem %s0, 226
    %s431 = smov 24
    %v432 = vld [vmem:[%s430] ss:$-48 sm:%s431]
    %vm433 = vcmask 1044483
    %v434 = vsel %vm433, %v432, %v429
    %s435 = scalar_lea.vmem %s0, 338
    %s436 = smov 96
    %v437 = vld [vmem:[%s435] ss:$-48 sm:%s436]
    %vm438 = vcmask 1046533
    %v439 = vsel %vm438, %v437, %v434
    %s440 = scalar_lea.vmem %s0, 107
    %v441 = vld [vmem:[%s440] sm:$0x80]
    %vm442 = vcmask 1047559
    %v443 = vsel %vm442, %v441, %v439
    %444 = vrot.lane.b32.xlu0 %v443, 16
    %v445 = vpop.permute.xlu0 %444
    %vm446 = vcmask 195712
    %447 = vst.msk [vmem:[#allocation0] sm:$0x3] %vm446, %v445
    %s448 = scalar_lea.vmem [#allocation0], 6
    %449 = vst.msk [vmem:[%s448] sm:$0xc] %vm446, %v445
    %s450 = scalar_lea.vmem [#allocation0], 12
    %451 = vst.msk [vmem:[%s450] sm:$0x30] %vm446, %v445
    %s452 = scalar_lea.vmem [#allocation0], 18
    %453 = vst.msk [vmem:[%s452] sm:$0xc0] %vm446, %v445
    %s454 = scalar_lea.vmem %s0, 1
    %v455 = vld [vmem:[%s454] sm:$0x1]
    %s456 = scalar_lea.vmem %s0, 113
    %s457 = smov 6
    %v458 = vld [vmem:[%s456] ss:$-48 sm:%s457]
    %vm459 = vcmask 1042433
    %v460 = vsel %vm459, %v458, %v455
    %s461 = scalar_lea.vmem %s0, 225
    %s462 = smov 24
    %v463 = vld [vmem:[%s461] ss:$-48 sm:%s462]
    %vm464 = vcmask 1044483
    %v465 = vsel %vm464, %v463, %v460
    %s466 = scalar_lea.vmem %s0, 337
    %s467 = smov 96
    %v468 = vld [vmem:[%s466] ss:$-48 sm:%s467]
    %vm469 = vcmask 1046533
    %v470 = vsel %vm469, %v468, %v465
    %s471 = scalar_lea.vmem %s0, 106
    %v472 = vld [vmem:[%s471] sm:$0x80]
    %vm473 = vcmask 1047559
    %v474 = vsel %vm473, %v472, %v470
    %475 = vrot.lane.b32.xlu0 %v474, 8
    %v476 = vpop.permute.xlu0 %475
    %vm477 = vcmask 130112
    %478 = vst.msk [vmem:[#allocation0] sm:$0x3] %vm477, %v476
    %s479 = scalar_lea.vmem [#allocation0], 6
    %480 = vst.msk [vmem:[%s479] sm:$0xc] %vm477, %v476
    %s481 = scalar_lea.vmem [#allocation0], 12
    %482 = vst.msk [vmem:[%s481] sm:$0x30] %vm477, %v476
    %s483 = scalar_lea.vmem [#allocation0], 18
    %484 = vst.msk [vmem:[%s483] sm:$0xc0] %vm477, %v476
    %s486 = ssub.s32 4, 1
    %v487 = vld [vmem:[#allocation0] sm:%s486]
    %s489 = ssub.s32 4, 1
    %490 = vst [vmem:[%s1] sm:%s489] %v487
    %s491 = scalar_lea.vmem [#allocation0], 8
    %v492 = vld [vmem:[%s491] sm:%s486]
    %s494 = ssub.s32 4, 1
    %s495 = scalar_lea.vmem %s1, 2
    %496 = vst [vmem:[%s495] sm:%s494] %v492
    %s497 = scalar_lea.vmem [#allocation0], 16
    %v498 = vld [vmem:[%s497] sm:%s486]
    %s500 = ssub.s32 4, 1
    %s501 = scalar_lea.vmem %s1, 4
    %502 = vst [vmem:[%s501] sm:%s500] %v498
    %s503 = scalar_lea.vmem [#allocation0], 24
    %v504 = vld [vmem:[%s503] sm:%s486]
    %s506 = ssub.s32 4, 1
    %s507 = scalar_lea.vmem %s1, 6
    %508 = vst [vmem:[%s507] sm:%s506] %v504

// kernel: masked_coordinate_predictor_forward.2
$region0: #{masked_coordinate_predictor_forward.2}
  #allocation0 [shape = 'u32[]', space=smem, size = 0x4, offset = 0x4, fixed_abs, tag = 'smem constant byte address 0x4 - core index']
  #allocation1 [shape = 'u32[72,128]{1,0:T(1,128)}', space=vmem, size = 0x9000, scoped, tag = 'internal scratch']
  %s0 = inlined_call_operand.vmem [shape: bf16[2,128,32], index: 0, kind: input, shape index: {}]
  %s1 = inlined_call_operand.vmem [shape: bf16[2,32,8], index: 1, kind: input, shape index: {}]
  %s2 = inlined_call_operand.vmem [shape: f32[2,1,8], index: 2, kind: input, shape index: {}]
  %s3 = inlined_call_operand.vmem [shape: f32[2,128,8], index: 3, kind: output, shape index: {}]
  %s4 = sld [smem:[#allocation0]]
  $region45: #{masked_coordinate_predictor_forward.2} parent=0
    _
  %s6 = ssub.s32 1, %s4
  %s7 = scalar_select 0, %s6, %s4
  loop: start=0, step=1, limit=4
  $region2: #{masked_coordinate_predictor_forward.2} parent=0 // loop_pre_header
    _
  $region3: #{masked_coordinate_predictor_forward.2} parent=0 // loop_header
    %s9 = sphi 0, %s13
    %p10 = scmp.ge.s32.totalorder %s9, 4
    %s16 = sphi 0, %s28
    %s17 = sphi 0, %s24
    %s18 = sphi 0, %s16
    %s19 = sphi 0, %s17
    %s20 = sphi 0, %s18
    %s21 = sphi 0, %s19
    %s33 = sphi 0, %s35
    %s36 = sphi 0, %s33
    %s37 = sphi 0, %s36
    %s53 = sphi 0, %s37
    %s59 = sphi 0, %s61
    %s62 = sphi 0, %s59
    %s63 = sphi 0, %s62
    %s79 = sphi 0, %s63
    %s85 = sphi 0, %s87
    %s88 = sphi 0, %s85
    %s89 = sphi 0, %s88
    %s105 = sphi 0, %s89
    %s113 = sphi 0, %s115
    %s116 = sphi 0, %s113
    %s117 = sphi 0, %s116
    %s133 = sphi 0, %s117
  $region4: #{masked_coordinate_predictor_forward.2} parent=0 // loop_header_branch
    %12 = sbr.rel (%p10) target = $region8
  $region5: #{masked_coordinate_predictor_forward.2} parent=0 // loop_body
    %s14 = ssub.s32 %s9, 1
    %s15 = ssub.s32 %s9, 2
    %s22 = sadd.s32 1, %s17
    %p23 = scmp.ge.s32.totalorder %s22, 1
    %s24 = scalar_select %p23, 0, %s22
    %s25 = sadd.s32 1, %s16
    %s26 = scalar_select %p23, %s25, %s16
    %p27 = scmp.ge.s32.totalorder %s26, 2
    %s28 = scalar_select %p27, 0, %s26
    %s29 = ssub.s32 %s16, %s28
    %s30 = ssub.s32 %s17, %s24
    %s31 = sor.u32 %s29, %s30
    %p32 = scmp.eq.s32.totalorder %s31, 0
    %s34 = sadd.s32 %s33, 1
    %s35 = scalar_select %p32, %s33, %s34
    %p38 = pneg %p32
    %p39 = scmp.eq.s32.totalorder %s9, 1
    %p40 = por %p38, %p39
    %p41 = scmp.ne.s32.totalorder %s33, %s36
    %p42 = scmp.eq.s32.totalorder %s9, 0
    %p43 = por %p41, %p42
    %p44 = scmp.ne.s32.totalorder %s33, %s36
    %p45 = scmp.eq.s32.totalorder %s14, 1
    %p46 = por %p44, %p45
    %p47 = scmp.ne.s32.totalorder %s36, %s37
    %p48 = scmp.eq.s32.totalorder %s14, 0
    %p49 = por %p47, %p48
    %p50 = scmp.ne.s32.totalorder %s36, %s37
    %p51 = scmp.eq.s32.totalorder %s15, 1
    %p52 = por %p50, %p51
    %p54 = scmp.ne.s32.totalorder %s37, %s53
    %p55 = scmp.eq.s32.totalorder %s15, 0
    %p56 = por %p54, %p55
    %s57 = ssub.s32 %s16, %s28
    %p58 = scmp.eq.s32.totalorder %s57, 0
    %s60 = sadd.s32 %s59, 1
    %s61 = scalar_select %p58, %s59, %s60
    %p64 = pneg %p58
    %p65 = scmp.eq.s32.totalorder %s9, 1
    %p66 = por %p64, %p65
    %p67 = scmp.ne.s32.totalorder %s59, %s62
    %p68 = scmp.eq.s32.totalorder %s9, 0
    %p69 = por %p67, %p68
    %p70 = scmp.ne.s32.totalorder %s59, %s62
    %p71 = scmp.eq.s32.totalorder %s14, 1
    %p72 = por %p70, %p71
    %p73 = scmp.ne.s32.totalorder %s62, %s63
    %p74 = scmp.eq.s32.totalorder %s14, 0
    %p75 = por %p73, %p74
    %p76 = scmp.ne.s32.totalorder %s62, %s63
    %p77 = scmp.eq.s32.totalorder %s15, 1
    %p78 = por %p76, %p77
    %p80 = scmp.ne.s32.totalorder %s63, %s79
    %p81 = scmp.eq.s32.totalorder %s15, 0
    %p82 = por %p80, %p81
    %s83 = ssub.s32 %s16, %s28
    %p84 = scmp.eq.s32.totalorder %s83, 0
    %s86 = sadd.s32 %s85, 1
    %s87 = scalar_select %p84, %s85, %s86
    %p90 = pneg %p84
    %p91 = scmp.eq.s32.totalorder %s9, 1
    %p92 = por %p90, %p91
    %p93 = scmp.ne.s32.totalorder %s85, %s88
    %p94 = scmp.eq.s32.totalorder %s9, 0
    %p95 = por %p93, %p94
    %p96 = scmp.ne.s32.totalorder %s85, %s88
    %p97 = scmp.eq.s32.totalorder %s14, 1
    %p98 = por %p96, %p97
    %p99 = scmp.ne.s32.totalorder %s88, %s89
    %p100 = scmp.eq.s32.totalorder %s14, 0
    %p101 = por %p99, %p100
    %p102 = scmp.ne.s32.totalorder %s88, %s89
    %p103 = scmp.eq.s32.totalorder %s15, 1
    %p104 = por %p102, %p103
    %p106 = scmp.ne.s32.totalorder %s89, %s105
    %p107 = scmp.eq.s32.totalorder %s15, 0
    %p108 = por %p106, %p107
    %s109 = ssub.s32 %s16, %s28
    %s110 = ssub.s32 %s17, %s24
    %s111 = sor.u32 %s109, %s110
    %p112 = scmp.eq.s32.totalorder %s111, 0
    %s114 = sadd.s32 %s113, 1
    %s115 = scalar_select %p112, %s113, %s114
    %p118 = pneg %p112
    %p119 = scmp.eq.s32.totalorder %s9, 1
    %p120 = por %p118, %p119
    %p121 = scmp.ne.s32.totalorder %s113, %s116
    %p122 = scmp.eq.s32.totalorder %s9, 0
    %p123 = por %p121, %p122
    %p124 = scmp.ne.s32.totalorder %s113, %s116
    %p125 = scmp.eq.s32.totalorder %s14, 1
    %p126 = por %p124, %p125
    %p127 = scmp.ne.s32.totalorder %s116, %s117
    %p128 = scmp.eq.s32.totalorder %s14, 0
    %p129 = por %p127, %p128
    %p130 = scmp.ne.s32.totalorder %s116, %s117
    %p131 = scmp.eq.s32.totalorder %s15, 1
    %p132 = por %p130, %p131
    %p134 = scmp.ne.s32.totalorder %s117, %s133
    %p135 = scmp.eq.s32.totalorder %s15, 0
    %p136 = por %p134, %p135
    %p137 = scmp.le.s32.totalorder 1, %s9
    %p138 = scmp.lt.s32.totalorder %s9, 3
    %p139 = pnand %p137, %p138
    %p140 = pneg %p139
    // Predicated region
    $region9: #{masked_coordinate_predictor_forward.2} parent=5 // pred_check
      _
    $region10: #{masked_coordinate_predictor_forward.2} parent=5 // pred_check_branch
      %142 = sbr.rel (%p139) target = $region12
    $region11: #{masked_coordinate_predictor_forward.2} parent=5 // pred_region
      %s143 = ssub.s32 %s9, 1
    $region12: #{masked_coordinate_predictor_forward.2} parent=5 // pred_fallthru
      _
    %p144 = scmp.lt.s32.totalorder %s9, 2
    // Predicated region
    $region13: #{masked_coordinate_predictor_forward.2} parent=5 // pred_check
      %p145 = pneg %p144
    $region14: #{masked_coordinate_predictor_forward.2} parent=5 // pred_check_branch
      %147 = sbr.rel (%p145) target = $region16
    $region15: #{masked_coordinate_predictor_forward.2} parent=5 // pred_region
      // Predicated region
      $region17: #{masked_coordinate_predictor_forward.2} parent=15 // pred_check
        %p148 = pneg %p43
      $region18: #{masked_coordinate_predictor_forward.2} parent=15 // pred_check_branch
        %150 = sbr.rel (%p148) target = $region20
      $region19: #{masked_coordinate_predictor_forward.2} parent=15 // pred_region
        %s151 = smul.u32 16, %s17
        %p152 = scmp.lt.s32.totalorder %s16, 1
        %s153 = scalar_select %p152, %s16, 1
        %p154 = scmp.lt.s32.totalorder %s151, 15
        %s155 = scalar_select %p154, %s151, 15
        %s156 = smul.addr %s153, 16
        %s157 = sadd.s32 %s155, %s156
        %s158 = smul.addr %s157, 4
        %s159 = scalar_lea.vmem %s0, %s158
        %s160 = smul.u32 16, %s17
      $region20: #{masked_coordinate_predictor_forward.2} parent=15 // pred_fallthru
        _
      // Predicated region
      $region21: #{masked_coordinate_predictor_forward.2} parent=15 // pred_check
        %p161 = pneg %p69
      $region22: #{masked_coordinate_predictor_forward.2} parent=15 // pred_check_branch
        %163 = sbr.rel (%p161) target = $region24
      $region23: #{masked_coordinate_predictor_forward.2} parent=15 // pred_region
        %p164 = scmp.lt.s32.totalorder %s16, 1
        %s165 = scalar_select %p164, %s16, 1
        %s166 = smul.addr %s165, 4
        %s167 = smul.addr %s166, 4
        %s168 = scalar_lea.vmem %s1, %s167
      $region24: #{masked_coordinate_predictor_forward.2} parent=15 // pred_fallthru
        _
      // Predicated region
      $region25: #{masked_coordinate_predictor_forward.2} parent=15 // pred_check
        %p169 = pneg %p95
      $region26: #{masked_coordinate_predictor_forward.2} parent=15 // pred_check_branch
        %171 = sbr.rel (%p169) target = $region28
      $region27: #{masked_coordinate_predictor_forward.2} parent=15 // pred_region
        %p172 = scmp.lt.s32.totalorder %s16, 1
        %s173 = scalar_select %p172, %s16, 1
        %s174 = scalar_lea.vmem %s2, %s173
      $region28: #{masked_coordinate_predictor_forward.2} parent=15 // pred_fallthru
        _
    $region16: #{masked_coordinate_predictor_forward.2} parent=5 // pred_fallthru
      _
    %p175 = scmp.le.s32.totalorder 1, %s9
    %p176 = scmp.lt.s32.totalorder %s9, 3
    %p177 = pnand %p175, %p176
    %p178 = pneg %p177
    // Predicated region
    $region29: #{masked_coordinate_predictor_forward.2} parent=5 // pred_check
      _
    $region30: #{masked_coordinate_predictor_forward.2} parent=5 // pred_check_branch
      %180 = sbr.rel (%p177) target = $region32
    $region31: #{masked_coordinate_predictor_forward.2} parent=5 // pred_region
      %s181 = ssub.s32 %s9, 1
      %s182 = smul.u32 16, %s19
      %p183 = scmp.lt.s32.totalorder %s18, 1
      %s184 = scalar_select %p183, %s18, 1
      %p185 = scmp.lt.s32.totalorder %s182, 15
      %s186 = scalar_select %p185, %s182, 15
      %s187 = smul.addr %s184, 16
      %s188 = sadd.s32 %s186, %s187
      %s189 = smul.addr %s188, 4
      %s190 = scalar_lea.vmem %s0, %s189
      %p191 = pneg %p49
      %p192 = pneg %p46
      %p193 = scmp.lt.s32.totalorder %s18, 1
      %s194 = scalar_select %p193, %s18, 1
      %s195 = smul.addr %s194, 4
      %s196 = smul.addr %s195, 4
      %s197 = scalar_lea.vmem %s1, %s196
      %p198 = pneg %p75
      %p199 = pneg %p72
      %p200 = scmp.lt.s32.totalorder %s18, 1
      %s201 = scalar_select %p200, %s18, 1
      %s202 = scalar_lea.vmem %s2, %s201
      %p203 = pneg %p101
      %p204 = pneg %p98
      %p205 = pneg %p129
      %p206 = pneg %p126
      %s207 = smul.u32 16, %s19
      %p208 = scmp.lt.s32.totalorder %s18, 1
      %s209 = scalar_select %p208, %s18, 1
      %p210 = scmp.lt.s32.totalorder %s207, 15
      %s211 = scalar_select %p210, %s207, 15
      %s212 = smul.addr %s209, 16
      %s213 = sadd.s32 %s211, %s212
      %s214 = smul.addr %s213, 8
      %s215 = scalar_lea.vmem %s3, %s214
      %s216 = smul.u32 16, %s19
      %p217 = scmp.lt.s32.totalorder %s18, 1
      %s218 = scalar_select %p217, %s18, 1
      %p219 = scmp.lt.s32.totalorder %s216, 15
      %s220 = scalar_select %p219, %s216, 15
      %s221 = smul.addr %s218, 16
      %s222 = sadd.s32 %s220, %s221
      %s223 = smul.addr %s222, 4
      %s224 = scalar_lea.vmem %s0, %s223
      %s225 = smul.u32 16, %s19
      %p226 = scmp.lt.s32.totalorder %s18, 1
      %s227 = scalar_select %p226, %s18, 1
      %s228 = smul.addr %s227, 4
      %s229 = smul.addr %s228, 4
      %s230 = scalar_lea.vmem %s1, %s229
      %p231 = scmp.lt.s32.totalorder %s18, 1
      %s232 = scalar_select %p231, %s18, 1
      %s233 = scalar_lea.vmem %s2, %s232
      %s234 = smul.u32 16, %s19
      %p235 = scmp.lt.s32.totalorder %s18, 1
      %s236 = scalar_select %p235, %s18, 1
      %p237 = scmp.lt.s32.totalorder %s234, 15
      %s238 = scalar_select %p237, %s234, 15
      %s239 = smul.addr %s236, 16
      %s240 = sadd.s32 %s238, %s239
      %s241 = smul.addr %s240, 8
      %s242 = scalar_lea.vmem %s3, %s241
      %s243 = smul.u32 16, %s19
      %v245 = vld [vmem:[%s224] sm:$0xf]
      %v246 = vld [vmem:[%s224 + $0x4] sm:$0xf]
      %v247 = vld [vmem:[%s224 + $0x8] sm:$0xf]
      %v248 = vld [vmem:[%s224 + $0xc] sm:$0xf]
      %v249 = vld [vmem:[%s224 + $0x10] sm:$0xf]
      %v250 = vld [vmem:[%s224 + $0x14] sm:$0xf]
      %v251 = vld [vmem:[%s224 + $0x18] sm:$0xf]
      %v252 = vld [vmem:[%s224 + $0x1c] sm:$0xf]
      %v253 = vld [vmem:[%s224 + $0x20] sm:$0xf]
      %v254 = vld [vmem:[%s224 + $0x24] sm:$0xf]
      %v255 = vld [vmem:[%s224 + $0x28] sm:$0xf]
      %v256 = vld [vmem:[%s224 + $0x2c] sm:$0xf]
      %v257 = vld [vmem:[%s224 + $0x30] sm:$0xf]
      %v258 = vld [vmem:[%s224 + $0x34] sm:$0xf]
      %v259 = vld [vmem:[%s224 + $0x38] sm:$0xf]
      %v260 = vld [vmem:[%s224 + $0x3c] sm:$0xf]
      %v261 = vld [vmem:[%s230] sm:$0xf]
      %v262 = vld [vmem:[%s230 + $0x4] sm:$0xf]
      %v263 = vld [vmem:[%s230 + $0x8] sm:$0xf]
      %v264 = vld [vmem:[%s230 + $0xc] sm:$0xf]
      %v265 = vld [vmem:[%s233] sm:$0x1]
      %v267 = vperm.slane %v265, 0
      %v285 = vunpack.c.l.b16 %v245
      %v286 = vunpack.c.l.b16 %v246
      %v287 = vunpack.c.l.b16 %v247
      %v288 = vunpack.c.l.b16 %v248
      %v289 = vunpack.c.l.b16 %v249
      %v290 = vunpack.c.l.b16 %v250
      %v291 = vunpack.c.l.b16 %v251
      %v292 = vunpack.c.l.b16 %v252
      %v293 = vunpack.c.l.b16 %v253
      %v294 = vunpack.c.l.b16 %v254
      %v295 = vunpack.c.l.b16 %v255
      %v296 = vunpack.c.l.b16 %v256
      %v297 = vunpack.c.l.b16 %v257
      %v298 = vunpack.c.l.b16 %v258
      %v299 = vunpack.c.l.b16 %v259
      %v300 = vunpack.c.l.b16 %v260
      %v301 = vpack.c.b16 %v286, %v285
      %v302 = vpack.c.b16 %v288, %v287
      %v303 = vpack.c.b16 %v290, %v289
      %v304 = vpack.c.b16 %v292, %v291
      %v305 = vpack.c.b16 %v294, %v293
      %v306 = vpack.c.b16 %v296, %v295
      %v307 = vpack.c.b16 %v298, %v297
      %v308 = vpack.c.b16 %v300, %v299
      %v313 = vunpack.c.l.b16 %v261
      %v314 = vunpack.c.l.b16 %v262
      %v315 = vunpack.c.l.b16 %v263
      %v316 = vunpack.c.l.b16 %v264
      %v317 = vpack.c.b16 %v314, %v313
      %v318 = vpack.c.b16 %v316, %v315
      %vm321 = vcmask 261120
      %v323 = vsel %vm321, %v301, 0
      %v326 = vsel %vm321, %v302, 0
      %v329 = vsel %vm321, %v303, 0
      %v332 = vsel %vm321, %v304, 0
      %v335 = vsel %vm321, %v305, 0
      %v338 = vsel %vm321, %v306, 0
      %v341 = vsel %vm321, %v307, 0
      %v344 = vsel %vm321, %v308, 0
      %346 = vmatpush.bf16.msra.mxu0 0
      %347 = vmatpush.bf16.msra.mxu0 0
      %348 = vmatpush.bf16.msra.mxu0 0
      %349 = vmatpush.bf16.msra.mxu0 0
      %350 = vmatpush.bf16.msra.mxu0 0
      %351 = vmatpush.bf16.msra.mxu0 0
      %352 = vmatpush.bf16.msra.mxu0 %v318
      %353 = vmatpush.bf16.msra.mxu0 %v317
      %354 = vmatmul.bf16.gmra.mxu0 %v323
      %v355 = vpop.f32.mrf.mxu0
      %v356 = vadd.f32 %v267, %v355
      %v357 = vpop.f32.mrf.mxu0
      %v358 = vadd.f32 %v267, %v357
      %359 = vmatmul.bf16.gmra.mxu0 %v326
      %v360 = vpop.f32.mrf.mxu0
      %v361 = vadd.f32 %v267, %v360
      %v362 = vpop.f32.mrf.mxu0
      %v363 = vadd.f32 %v267, %v362
      %364 = vmatmul.bf16.gmra.mxu0 %v329
      %v365 = vpop.f32.mrf.mxu0
      %v366 = vadd.f32 %v267, %v365
      %v367 = vpop.f32.mrf.mxu0
      %v368 = vadd.f32 %v267, %v367
      %369 = vmatmul.bf16.gmra.mxu0 %v332
      %v370 = vpop.f32.mrf.mxu0
      %v371 = vadd.f32 %v267, %v370
      %v372 = vpop.f32.mrf.mxu0
      %v373 = vadd.f32 %v267, %v372
      %374 = vmatmul.bf16.gmra.mxu0 %v335
      %v375 = vpop.f32.mrf.mxu0
      %v376 = vadd.f32 %v267, %v375
      %v377 = vpop.f32.mrf.mxu0
      %v378 = vadd.f32 %v267, %v377
      %379 = vmatmul.bf16.gmra.mxu0 %v338
      %v380 = vpop.f32.mrf.mxu0
      %v381 = vadd.f32 %v267, %v380
      %v382 = vpop.f32.mrf.mxu0
      %v383 = vadd.f32 %v267, %v382
      %384 = vmatmul.bf16.gmra.mxu0 %v341
      %v385 = vpop.f32.mrf.mxu0
      %v386 = vadd.f32 %v267, %v385
      %v387 = vpop.f32.mrf.mxu0
      %v388 = vadd.f32 %v267, %v387
      %389 = vmatmul.bf16.gmra.mxu0 %v344
      %v390 = vpop.f32.mrf.mxu0
      %v391 = vadd.f32 %v267, %v390
      %v392 = vpop.f32.mrf.mxu0
      %v393 = vadd.f32 %v267, %v392
      %394 = vdwg.mxu0
      %v395 = vmax.f32 %v356, 0.0
      %v396 = vmax.f32 %v358, 0.0
      %v397 = vmax.f32 %v361, 0.0
      %v398 = vmax.f32 %v363, 0.0
      %v399 = vmax.f32 %v366, 0.0
      %v400 = vmax.f32 %v368, 0.0
      %v401 = vmax.f32 %v371, 0.0
      %v402 = vmax.f32 %v373, 0.0
      %v403 = vmax.f32 %v376, 0.0
      %v404 = vmax.f32 %v378, 0.0
      %v405 = vmax.f32 %v381, 0.0
      %v406 = vmax.f32 %v383, 0.0
      %v407 = vmax.f32 %v386, 0.0
      %v408 = vmax.f32 %v388, 0.0
      %v409 = vmax.f32 %v391, 0.0
      %v410 = vmax.f32 %v393, 0.0
      %vm411 = vcmask 64512
      %412 = vst.msk [vmem:[%s242] sm:$0xff] %vm411, %v395
      %413 = vst.msk [vmem:[%s242 + $0x8] sm:$0xff] %vm411, %v396
      %414 = vst.msk [vmem:[%s242 + $0x10] sm:$0xff] %vm411, %v397
      %415 = vst.msk [vmem:[%s242 + $0x18] sm:$0xff] %vm411, %v398
      %416 = vst.msk [vmem:[%s242 + $0x20] sm:$0xff] %vm411, %v399
      %417 = vst.msk [vmem:[%s242 + $0x28] sm:$0xff] %vm411, %v400
      %418 = vst.msk [vmem:[%s242 + $0x30] sm:$0xff] %vm411, %v401
      %419 = vst.msk [vmem:[%s242 + $0x38] sm:$0xff] %vm411, %v402
      %420 = vst.msk [vmem:[%s242 + $0x40] sm:$0xff] %vm411, %v403
      %421 = vst.msk [vmem:[%s242 + $0x48] sm:$0xff] %vm411, %v404
      %422 = vst.msk [vmem:[%s242 + $0x50] sm:$0xff] %vm411, %v405
      %423 = vst.msk [vmem:[%s242 + $0x58] sm:$0xff] %vm411, %v406
      %424 = vst.msk [vmem:[%s242 + $0x60] sm:$0xff] %vm411, %v407
      %425 = vst.msk [vmem:[%s242 + $0x68] sm:$0xff] %vm411, %v408
      %426 = vst.msk [vmem:[%s242 + $0x70] sm:$0xff] %vm411, %v409
      %427 = vst.msk [vmem:[%s242 + $0x78] sm:$0xff] %vm411, %v410
      %s428 = smul.u32 16, %s19
      %p429 = scmp.lt.s32.totalorder %s18, 1
      %s430 = scalar_select %p429, %s18, 1
      %p431 = scmp.lt.s32.totalorder %s428, 15
      %s432 = scalar_select %p431, %s428, 15
      %s433 = smul.addr %s430, 16
      %s434 = sadd.s32 %s432, %s433
      %s435 = smul.addr %s434, 8
      %s436 = scalar_lea.vmem %s3, %s435
      // Predicated region
      $region33: #{masked_coordinate_predictor_forward.2} parent=31 // pred_check
        %p437 = pneg %p126
      $region34: #{masked_coordinate_predictor_forward.2} parent=31 // pred_check_branch
        %439 = sbr.rel (%p437) target = $region36
      $region35: #{masked_coordinate_predictor_forward.2} parent=31 // pred_region
        %s440 = smul.u32 16, %s19
      $region36: #{masked_coordinate_predictor_forward.2} parent=31 // pred_fallthru
        _
    $region32: #{masked_coordinate_predictor_forward.2} parent=5 // pred_fallthru
      _
    %p441 = scmp.le.s32.totalorder 2, %s9
    // Predicated region
    $region37: #{masked_coordinate_predictor_forward.2} parent=5 // pred_check
      %p442 = pneg %p441
    $region38: #{masked_coordinate_predictor_forward.2} parent=5 // pred_check_branch
      %444 = sbr.rel (%p442) target = $region40
    $region39: #{masked_coordinate_predictor_forward.2} parent=5 // pred_region
      %s445 = ssub.s32 %s9, 2
      // Predicated region
      $region41: #{masked_coordinate_predictor_forward.2} parent=39 // pred_check
        %p446 = pneg %p132
      $region42: #{masked_coordinate_predictor_forward.2} parent=39 // pred_check_branch
        %448 = sbr.rel (%p446) target = $region44
      $region43: #{masked_coordinate_predictor_forward.2} parent=39 // pred_region
        %s449 = smul.u32 16, %s21
        %p450 = scmp.lt.s32.totalorder %s20, 1
        %s451 = scalar_select %p450, %s20, 1
        %p452 = scmp.lt.s32.totalorder %s449, 15
        %s453 = scalar_select %p452, %s449, 15
        %s454 = smul.addr %s451, 16
        %s455 = sadd.s32 %s453, %s454
        %s456 = smul.addr %s455, 8
        %s457 = scalar_lea.vmem %s3, %s456
      $region44: #{masked_coordinate_predictor_forward.2} parent=39 // pred_fallthru
        _
    $region40: #{masked_coordinate_predictor_forward.2} parent=5 // pred_fallthru
      _
  $region6: #{masked_coordinate_predictor_forward.2} parent=0 // loop_footer
    %s13 = sadd.s32 1, %s9
  $region7: #{masked_coordinate_predictor_forward.2} parent=0 // loop_footer_branch
    %8 = sbr.rel target = $region3
  $region8: #{masked_coordinate_predictor_forward.2} parent=0 // loop_exit
    _

// kernel: masked_coordinate_predictor_forward.3
$region0: #{masked_coordinate_predictor_forward.3}
  #allocation0 [shape = 'u32[]', space=smem, size = 0x4, offset = 0x4, fixed_abs, tag = 'smem constant byte address 0x4 - core index']
  #allocation1 [shape = 'u32[72,128]{1,0:T(1,128)}', space=vmem, size = 0x9000, scoped, tag = 'internal scratch']
  %s0 = inlined_call_operand.vmem [shape: f32[2,512], index: 0, kind: input, shape index: {}]
  %s1 = inlined_call_operand.vmem [shape: f32[2,512], index: 1, kind: input, shape index: {}]
  %s2 = inlined_call_operand.vmem [shape: bf16[512,32], index: 2, kind: input, shape index: {}]
  %s3 = inlined_call_operand.vmem [shape: bf16[512,32], index: 3, kind: input, shape index: {}]
  %s4 = inlined_call_operand.vmem [shape: f32[1,32], index: 4, kind: input, shape index: {}]
  %s5 = inlined_call_operand.vmem [shape: f32[32,32], index: 5, kind: input, shape index: {}]
  %s6 = inlined_call_operand.vmem [shape: f32[1,32], index: 6, kind: input, shape index: {}]
  %s7 = inlined_call_operand.vmem [shape: f32[32,32], index: 7, kind: input, shape index: {}]
  %s8 = inlined_call_operand.vmem [shape: f32[1,32], index: 8, kind: input, shape index: {}]
  %s9 = inlined_call_operand.vmem [shape: f32[32,2], index: 9, kind: input, shape index: {}]
  %s10 = inlined_call_operand.vmem [shape: f32[1,2], index: 10, kind: input, shape index: {}]
  %s11 = inlined_call_operand.hbm [shape: f32[2,2], index: 11, kind: output, shape index: {}]
  %s12 = sld [smem:[#allocation0]]
  $region54: #{masked_coordinate_predictor_forward.3} parent=0
    _
  %s14 = ssub.s32 1, %s12
  %s15 = scalar_select 0, %s14, %s12
  $region1: #{masked_coordinate_predictor_forward.3} parent=0
    #allocation2 [shape = 'u8[1024]{0}', space=vmem, size = 0x400, scoped, tag = 'output window, operand 0, single buffered']
    #allocation3 [shape = 's32[1]{0}', space=sflag, size = 0x4, scoped, tag = 'scoped memory for masked_coordinate_predictor_forward.3']
    %16 = vsyncpa [#allocation3], 0
    // Predicated region
    $region2: #{masked_coordinate_predictor_forward.3} parent=1 // pred_check
      _
    $region3: #{masked_coordinate_predictor_forward.3} parent=1 // pred_check_branch
      %18 = sbr.rel (0) target = $region5
    $region4: #{masked_coordinate_predictor_forward.3} parent=1 // pred_region
      _
    $region5: #{masked_coordinate_predictor_forward.3} parent=1 // pred_fallthru
      _
    // Predicated region
    $region6: #{masked_coordinate_predictor_forward.3} parent=1 // pred_check
      _
    $region7: #{masked_coordinate_predictor_forward.3} parent=1 // pred_check_branch
      %20 = sbr.rel (0) target = $region9
    $region8: #{masked_coordinate_predictor_forward.3} parent=1 // pred_region
      _
    $region9: #{masked_coordinate_predictor_forward.3} parent=1 // pred_fallthru
      _
    // Predicated region
    $region10: #{masked_coordinate_predictor_forward.3} parent=1 // pred_check
      _
    $region11: #{masked_coordinate_predictor_forward.3} parent=1 // pred_check_branch
      %22 = sbr.rel (0) target = $region13
    $region12: #{masked_coordinate_predictor_forward.3} parent=1 // pred_region
      _
    $region13: #{masked_coordinate_predictor_forward.3} parent=1 // pred_fallthru
      _
    // Predicated region
    $region14: #{masked_coordinate_predictor_forward.3} parent=1 // pred_check
      _
    $region15: #{masked_coordinate_predictor_forward.3} parent=1 // pred_check_branch
      %24 = sbr.rel (0) target = $region17
    $region16: #{masked_coordinate_predictor_forward.3} parent=1 // pred_region
      _
    $region17: #{masked_coordinate_predictor_forward.3} parent=1 // pred_fallthru
      _
    // Predicated region
    $region18: #{masked_coordinate_predictor_forward.3} parent=1 // pred_check
      _
    $region19: #{masked_coordinate_predictor_forward.3} parent=1 // pred_check_branch
      %26 = sbr.rel (0) target = $region21
    $region20: #{masked_coordinate_predictor_forward.3} parent=1 // pred_region
      _
    $region21: #{masked_coordinate_predictor_forward.3} parent=1 // pred_fallthru
      _
    // Predicated region
    $region22: #{masked_coordinate_predictor_forward.3} parent=1 // pred_check
      _
    $region23: #{masked_coordinate_predictor_forward.3} parent=1 // pred_check_branch
      %28 = sbr.rel (0) target = $region25
    $region24: #{masked_coordinate_predictor_forward.3} parent=1 // pred_region
      _
    $region25: #{masked_coordinate_predictor_forward.3} parent=1 // pred_fallthru
      _
    // Predicated region
    $region26: #{masked_coordinate_predictor_forward.3} parent=1 // pred_check
      _
    $region27: #{masked_coordinate_predictor_forward.3} parent=1 // pred_check_branch
      %30 = sbr.rel (0) target = $region29
    $region28: #{masked_coordinate_predictor_forward.3} parent=1 // pred_region
      _
    $region29: #{masked_coordinate_predictor_forward.3} parent=1 // pred_fallthru
      _
    // Predicated region
    $region30: #{masked_coordinate_predictor_forward.3} parent=1 // pred_check
      _
    $region31: #{masked_coordinate_predictor_forward.3} parent=1 // pred_check_branch
      %32 = sbr.rel (0) target = $region33
    $region32: #{masked_coordinate_predictor_forward.3} parent=1 // pred_region
      _
    $region33: #{masked_coordinate_predictor_forward.3} parent=1 // pred_fallthru
      _
    // Predicated region
    $region34: #{masked_coordinate_predictor_forward.3} parent=1 // pred_check
      _
    $region35: #{masked_coordinate_predictor_forward.3} parent=1 // pred_check_branch
      %34 = sbr.rel (0) target = $region37
    $region36: #{masked_coordinate_predictor_forward.3} parent=1 // pred_region
      _
    $region37: #{masked_coordinate_predictor_forward.3} parent=1 // pred_fallthru
      _
    // Predicated region
    $region38: #{masked_coordinate_predictor_forward.3} parent=1 // pred_check
      _
    $region39: #{masked_coordinate_predictor_forward.3} parent=1 // pred_check_branch
      %36 = sbr.rel (0) target = $region41
    $region40: #{masked_coordinate_predictor_forward.3} parent=1 // pred_region
      _
    $region41: #{masked_coordinate_predictor_forward.3} parent=1 // pred_fallthru
      _
    // Predicated region
    $region42: #{masked_coordinate_predictor_forward.3} parent=1 // pred_check
      _
    $region43: #{masked_coordinate_predictor_forward.3} parent=1 // pred_check_branch
      %38 = sbr.rel (0) target = $region45
    $region44: #{masked_coordinate_predictor_forward.3} parent=1 // pred_region
      _
    $region45: #{masked_coordinate_predictor_forward.3} parent=1 // pred_fallthru
      _
    %v39 = vld [vmem:[%s0] sm:$0xff]
    %41 = vst [vmem:[#allocation1] ss:$4 sm:$0xff] %v39
    %v42 = vld.sshfl [vmem:[#allocation1] sm:$0xff pattern:$0x73625140]
    %v43 = vld.sshfl [vmem:[#allocation1 + $0x8] sm:$0xff pattern:$0x73625140]
    %v44 = vld.sshfl [vmem:[#allocation1 + $0x10] sm:$0xff pattern:$0x73625140]
    %v45 = vld.sshfl [vmem:[#allocation1 + $0x18] sm:$0xff pattern:$0x73625140]
    %v50 = vpack.c.bf16 %v42, %v42
    %v51 = vpack.c.bf16 %v43, %v43
    %v52 = vpack.c.bf16 %v44, %v44
    %v53 = vpack.c.bf16 %v45, %v45
    %v54 = vld [vmem:[%s1] sm:$0xff]
    %56 = vst [vmem:[#allocation1] ss:$4 sm:$0xff] %v54
    %v57 = vld.sshfl [vmem:[#allocation1] sm:$0xff pattern:$0x73625140]
    %v58 = vld.sshfl [vmem:[#allocation1 + $0x8] sm:$0xff pattern:$0x73625140]
    %v59 = vld.sshfl [vmem:[#allocation1 + $0x10] sm:$0xff pattern:$0x73625140]
    %v60 = vld.sshfl [vmem:[#allocation1 + $0x18] sm:$0xff pattern:$0x73625140]
    %v65 = vpack.c.bf16 %v57, %v57
    %v66 = vpack.c.bf16 %v58, %v58
    %v67 = vpack.c.bf16 %v59, %v59
    %v68 = vpack.c.bf16 %v60, %v60
    %v69 = vld [vmem:[%s2] sm:$0xf]
    %v70 = vld [vmem:[%s2 + $0x4] sm:$0xf]
    %v71 = vld [vmem:[%s2 + $0x8] sm:$0xf]
    %v72 = vld [vmem:[%s2 + $0xc] sm:$0xf]
    %v73 = vld [vmem:[%s2 + $0x10] sm:$0xf]
    %v74 = vld [vmem:[%s2 + $0x14] sm:$0xf]
    %v75 = vld [vmem:[%s2 + $0x18] sm:$0xf]
    %v76 = vld [vmem:[%s2 + $0x1c] sm:$0xf]
    %v77 = vld [vmem:[%s2 + $0x20] sm:$0xf]
    %v78 = vld [vmem:[%s2 + $0x24] sm:$0xf]
    %v79 = vld [vmem:[%s2 + $0x28] sm:$0xf]
    %v80 = vld [vmem:[%s2 + $0x2c] sm:$0xf]
    %v81 = vld [vmem:[%s2 + $0x30] sm:$0xf]
    %v82 = vld [vmem:[%s2 + $0x34] sm:$0xf]
    %v83 = vld [vmem:[%s2 + $0x38] sm:$0xf]
    %v84 = vld [vmem:[%s2 + $0x3c] sm:$0xf]
    %v85 = vld [vmem:[%s2 + $0x40] sm:$0xf]
    %v86 = vld [vmem:[%s2 + $0x44] sm:$0xf]
    %v87 = vld [vmem:[%s2 + $0x48] sm:$0xf]
    %v88 = vld [vmem:[%s2 + $0x4c] sm:$0xf]
    %v89 = vld [vmem:[%s2 + $0x50] sm:$0xf]
    %v90 = vld [vmem:[%s2 + $0x54] sm:$0xf]
    %v91 = vld [vmem:[%s2 + $0x58] sm:$0xf]
    %v92 = vld [vmem:[%s2 + $0x5c] sm:$0xf]
    %v93 = vld [vmem:[%s2 + $0x60] sm:$0xf]
    %v94 = vld [vmem:[%s2 + $0x64] sm:$0xf]
    %v95 = vld [vmem:[%s2 + $0x68] sm:$0xf]
    %v96 = vld [vmem:[%s2 + $0x6c] sm:$0xf]
    %v97 = vld [vmem:[%s2 + $0x70] sm:$0xf]
    %v98 = vld [vmem:[%s2 + $0x74] sm:$0xf]
    %v99 = vld [vmem:[%s2 + $0x78] sm:$0xf]
    %v100 = vld [vmem:[%s2 + $0x7c] sm:$0xf]
    %v101 = vld [vmem:[%s2 + $0x80] sm:$0xf]
    %v102 = vld [vmem:[%s2 + $0x84] sm:$0xf]
    %v103 = vld [vmem:[%s2 + $0x88] sm:$0xf]
    %v104 = vld [vmem:[%s2 + $0x8c] sm:$0xf]
    %v105 = vld [vmem:[%s2 + $0x90] sm:$0xf]
    %v106 = vld [vmem:[%s2 + $0x94] sm:$0xf]
    %v107 = vld [vmem:[%s2 + $0x98] sm:$0xf]
    %v108 = vld [vmem:[%s2 + $0x9c] sm:$0xf]
    %v109 = vld [vmem:[%s2 + $0xa0] sm:$0xf]
    %v110 = vld [vmem:[%s2 + $0xa4] sm:$0xf]
    %v111 = vld [vmem:[%s2 + $0xa8] sm:$0xf]
    %v112 = vld [vmem:[%s2 + $0xac] sm:$0xf]
    %v113 = vld [vmem:[%s2 + $0xb0] sm:$0xf]
    %v114 = vld [vmem:[%s2 + $0xb4] sm:$0xf]
    %v115 = vld [vmem:[%s2 + $0xb8] sm:$0xf]
    %v116 = vld [vmem:[%s2 + $0xbc] sm:$0xf]
    %v117 = vld [vmem:[%s2 + $0xc0] sm:$0xf]
    %v118 = vld [vmem:[%s2 + $0xc4] sm:$0xf]
    %v119 = vld [vmem:[%s2 + $0xc8] sm:$0xf]
    %v120 = vld [vmem:[%s2 + $0xcc] sm:$0xf]
    %v121 = vld [vmem:[%s2 + $0xd0] sm:$0xf]
    %v122 = vld [vmem:[%s2 + $0xd4] sm:$0xf]
    %v123 = vld [vmem:[%s2 + $0xd8] sm:$0xf]
    %v124 = vld [vmem:[%s2 + $0xdc] sm:$0xf]
    %v125 = vld [vmem:[%s2 + $0xe0] sm:$0xf]
    %v126 = vld [vmem:[%s2 + $0xe4] sm:$0xf]
    %v127 = vld [vmem:[%s2 + $0xe8] sm:$0xf]
    %v128 = vld [vmem:[%s2 + $0xec] sm:$0xf]
    %v129 = vld [vmem:[%s2 + $0xf0] sm:$0xf]
    %v130 = vld [vmem:[%s2 + $0xf4] sm:$0xf]
    %v131 = vld [vmem:[%s2 + $0xf8] sm:$0xf]
    %v132 = vld [vmem:[%s2 + $0xfc] sm:$0xf]
    %v133 = vld [vmem:[%s3] sm:$0xf]
    %v134 = vld [vmem:[%s3 + $0x4] sm:$0xf]
    %v135 = vld [vmem:[%s3 + $0x8] sm:$0xf]
    %v136 = vld [vmem:[%s3 + $0xc] sm:$0xf]
    %v137 = vld [vmem:[%s3 + $0x10] sm:$0xf]
    %v138 = vld [vmem:[%s3 + $0x14] sm:$0xf]
    %v139 = vld [vmem:[%s3 + $0x18] sm:$0xf]
    %v140 = vld [vmem:[%s3 + $0x1c] sm:$0xf]
    %v141 = vld [vmem:[%s3 + $0x20] sm:$0xf]
    %v142 = vld [vmem:[%s3 + $0x24] sm:$0xf]
    %v143 = vld [vmem:[%s3 + $0x28] sm:$0xf]
    %v144 = vld [vmem:[%s3 + $0x2c] sm:$0xf]
    %v145 = vld [vmem:[%s3 + $0x30] sm:$0xf]
    %v146 = vld [vmem:[%s3 + $0x34] sm:$0xf]
    %v147 = vld [vmem:[%s3 + $0x38] sm:$0xf]
    %v148 = vld [vmem:[%s3 + $0x3c] sm:$0xf]
    %v149 = vld [vmem:[%s3 + $0x40] sm:$0xf]
    %v150 = vld [vmem:[%s3 + $0x44] sm:$0xf]
    %v151 = vld [vmem:[%s3 + $0x48] sm:$0xf]
    %v152 = vld [vmem:[%s3 + $0x4c] sm:$0xf]
    %v153 = vld [vmem:[%s3 + $0x50] sm:$0xf]
    %v154 = vld [vmem:[%s3 + $0x54] sm:$0xf]
    %v155 = vld [vmem:[%s3 + $0x58] sm:$0xf]
    %v156 = vld [vmem:[%s3 + $0x5c] sm:$0xf]
    %v157 = vld [vmem:[%s3 + $0x60] sm:$0xf]
    %v158 = vld [vmem:[%s3 + $0x64] sm:$0xf]
    %v159 = vld [vmem:[%s3 + $0x68] sm:$0xf]
    %v160 = vld [vmem:[%s3 + $0x6c] sm:$0xf]
    %v161 = vld [vmem:[%s3 + $0x70] sm:$0xf]
    %v162 = vld [vmem:[%s3 + $0x74] sm:$0xf]
    %v163 = vld [vmem:[%s3 + $0x78] sm:$0xf]
    %v164 = vld [vmem:[%s3 + $0x7c] sm:$0xf]
    %v165 = vld [vmem:[%s3 + $0x80] sm:$0xf]
    %v166 = vld [vmem:[%s3 + $0x84] sm:$0xf]
    %v167 = vld [vmem:[%s3 + $0x88] sm:$0xf]
    %v168 = vld [vmem:[%s3 + $0x8c] sm:$0xf]
    %v169 = vld [vmem:[%s3 + $0x90] sm:$0xf]
    %v170 = vld [vmem:[%s3 + $0x94] sm:$0xf]
    %v171 = vld [vmem:[%s3 + $0x98] sm:$0xf]
    %v172 = vld [vmem:[%s3 + $0x9c] sm:$0xf]
    %v173 = vld [vmem:[%s3 + $0xa0] sm:$0xf]
    %v174 = vld [vmem:[%s3 + $0xa4] sm:$0xf]
    %v175 = vld [vmem:[%s3 + $0xa8] sm:$0xf]
    %v176 = vld [vmem:[%s3 + $0xac] sm:$0xf]
    %v177 = vld [vmem:[%s3 + $0xb0] sm:$0xf]
    %v178 = vld [vmem:[%s3 + $0xb4] sm:$0xf]
    %v179 = vld [vmem:[%s3 + $0xb8] sm:$0xf]
    %v180 = vld [vmem:[%s3 + $0xbc] sm:$0xf]
    %v181 = vld [vmem:[%s3 + $0xc0] sm:$0xf]
    %v182 = vld [vmem:[%s3 + $0xc4] sm:$0xf]
    %v183 = vld [vmem:[%s3 + $0xc8] sm:$0xf]
    %v184 = vld [vmem:[%s3 + $0xcc] sm:$0xf]
    %v185 = vld [vmem:[%s3 + $0xd0] sm:$0xf]
    %v186 = vld [vmem:[%s3 + $0xd4] sm:$0xf]
    %v187 = vld [vmem:[%s3 + $0xd8] sm:$0xf]
    %v188 = vld [vmem:[%s3 + $0xdc] sm:$0xf]
    %v189 = vld [vmem:[%s3 + $0xe0] sm:$0xf]
    %v190 = vld [vmem:[%s3 + $0xe4] sm:$0xf]
    %v191 = vld [vmem:[%s3 + $0xe8] sm:$0xf]
    %v192 = vld [vmem:[%s3 + $0xec] sm:$0xf]
    %v193 = vld [vmem:[%s3 + $0xf0] sm:$0xf]
    %v194 = vld [vmem:[%s3 + $0xf4] sm:$0xf]
    %v195 = vld [vmem:[%s3 + $0xf8] sm:$0xf]
    %v196 = vld [vmem:[%s3 + $0xfc] sm:$0xf]
    %v261 = vunpack.c.l.b16 %v133
    %v262 = vunpack.c.l.b16 %v134
    %v263 = vunpack.c.l.b16 %v135
    %v264 = vunpack.c.l.b16 %v136
    %v265 = vunpack.c.l.b16 %v137
    %v266 = vunpack.c.l.b16 %v138
    %v267 = vunpack.c.l.b16 %v139
    %v268 = vunpack.c.l.b16 %v140
    %v269 = vunpack.c.l.b16 %v141
    %v270 = vunpack.c.l.b16 %v142
    %v271 = vunpack.c.l.b16 %v143
    %v272 = vunpack.c.l.b16 %v144
    %v273 = vunpack.c.l.b16 %v145
    %v274 = vunpack.c.l.b16 %v146
    %v275 = vunpack.c.l.b16 %v147
    %v276 = vunpack.c.l.b16 %v148
    %v277 = vunpack.c.l.b16 %v149
    %v278 = vunpack.c.l.b16 %v150
    %v279 = vunpack.c.l.b16 %v151
    %v280 = vunpack.c.l.b16 %v152
    %v281 = vunpack.c.l.b16 %v153
    %v282 = vunpack.c.l.b16 %v154
    %v283 = vunpack.c.l.b16 %v155
    %v284 = vunpack.c.l.b16 %v156
    %v285 = vunpack.c.l.b16 %v157
    %v286 = vunpack.c.l.b16 %v158
    %v287 = vunpack.c.l.b16 %v159
    %v288 = vunpack.c.l.b16 %v160
    %v289 = vunpack.c.l.b16 %v161
    %v290 = vunpack.c.l.b16 %v162
    %v291 = vunpack.c.l.b16 %v163
    %v292 = vunpack.c.l.b16 %v164
    %v293 = vunpack.c.l.b16 %v165
    %v294 = vunpack.c.l.b16 %v166
    %v295 = vunpack.c.l.b16 %v167
    %v296 = vunpack.c.l.b16 %v168
    %v297 = vunpack.c.l.b16 %v169
    %v298 = vunpack.c.l.b16 %v170
    %v299 = vunpack.c.l.b16 %v171
    %v300 = vunpack.c.l.b16 %v172
    %v301 = vunpack.c.l.b16 %v173
    %v302 = vunpack.c.l.b16 %v174
    %v303 = vunpack.c.l.b16 %v175
    %v304 = vunpack.c.l.b16 %v176
    %v305 = vunpack.c.l.b16 %v177
    %v306 = vunpack.c.l.b16 %v178
    %v307 = vunpack.c.l.b16 %v179
    %v308 = vunpack.c.l.b16 %v180
    %v309 = vunpack.c.l.b16 %v181
    %v310 = vunpack.c.l.b16 %v182
    %v311 = vunpack.c.l.b16 %v183
    %v312 = vunpack.c.l.b16 %v184
    %v313 = vunpack.c.l.b16 %v185
    %v314 = vunpack.c.l.b16 %v186
    %v315 = vunpack.c.l.b16 %v187
    %v316 = vunpack.c.l.b16 %v188
    %v317 = vunpack.c.l.b16 %v189
    %v318 = vunpack.c.l.b16 %v190
    %v319 = vunpack.c.l.b16 %v191
    %v320 = vunpack.c.l.b16 %v192
    %v321 = vunpack.c.l.b16 %v193
    %v322 = vunpack.c.l.b16 %v194
    %v323 = vunpack.c.l.b16 %v195
    %v324 = vunpack.c.l.b16 %v196
    %v325 = vpack.c.b16 %v262, %v261
    %v326 = vpack.c.b16 %v264, %v263
    %v327 = vpack.c.b16 %v266, %v265
    %v328 = vpack.c.b16 %v268, %v267
    %v329 = vpack.c.b16 %v270, %v269
    %v330 = vpack.c.b16 %v272, %v271
    %v331 = vpack.c.b16 %v274, %v273
    %v332 = vpack.c.b16 %v276, %v275
    %v333 = vpack.c.b16 %v278, %v277
    %v334 = vpack.c.b16 %v280, %v279
    %v335 = vpack.c.b16 %v282, %v281
    %v336 = vpack.c.b16 %v284, %v283
    %v337 = vpack.c.b16 %v286, %v285
    %v338 = vpack.c.b16 %v288, %v287
    %v339 = vpack.c.b16 %v290, %v289
    %v340 = vpack.c.b16 %v292, %v291
    %v341 = vpack.c.b16 %v294, %v293
    %v342 = vpack.c.b16 %v296, %v295
    %v343 = vpack.c.b16 %v298, %v297
    %v344 = vpack.c.b16 %v300, %v299
    %v345 = vpack.c.b16 %v302, %v301
    %v346 = vpack.c.b16 %v304, %v303
    %v347 = vpack.c.b16 %v306, %v305
    %v348 = vpack.c.b16 %v308, %v307
    %v349 = vpack.c.b16 %v310, %v309
    %v350 = vpack.c.b16 %v312, %v311
    %v351 = vpack.c.b16 %v314, %v313
    %v352 = vpack.c.b16 %v316, %v315
    %v353 = vpack.c.b16 %v318, %v317
    %v354 = vpack.c.b16 %v320, %v319
    %v355 = vpack.c.b16 %v322, %v321
    %v356 = vpack.c.b16 %v324, %v323
    %389 = vmatpush.bf16.msra.mxu0 %v332
    %390 = vmatpush.bf16.msra.mxu0 %v331
    %391 = vmatpush.bf16.msra.mxu0 %v330
    %392 = vmatpush.bf16.msra.mxu0 %v329
    %393 = vmatpush.bf16.msra.mxu0 %v328
    %394 = vmatpush.bf16.msra.mxu0 %v327
    %395 = vmatpush.bf16.msra.mxu0 %v326
    %396 = vmatpush.bf16.msra.mxu0 %v325
    %397 = vmatmul.bf16.gmra.mxu0 %v65
    %v398 = vpop.f32.mrf.mxu0
    %v399 = vadd.f32 0.0, %v398
    %v400 = vpop.f32.mrf.mxu0
    %401 = vdwg.mxu0
    %402 = vmatpush.bf16.msra.mxu0 %v340
    %403 = vmatpush.bf16.msra.mxu0 %v339
    %404 = vmatpush.bf16.msra.mxu0 %v338
    %405 = vmatpush.bf16.msra.mxu0 %v337
    %406 = vmatpush.bf16.msra.mxu0 %v336
    %407 = vmatpush.bf16.msra.mxu0 %v335
    %408 = vmatpush.bf16.msra.mxu0 %v334
    %409 = vmatpush.bf16.msra.mxu0 %v333
    %410 = vmatmul.bf16.gmra.mxu0 %v66
    %v411 = vpop.f32.mrf.mxu0
    %v412 = vadd.f32 %v399, %v411
    %v413 = vpop.f32.mrf.mxu0
    %414 = vdwg.mxu0
    %415 = vmatpush.bf16.msra.mxu0 %v348
    %416 = vmatpush.bf16.msra.mxu0 %v347
    %417 = vmatpush.bf16.msra.mxu0 %v346
    %418 = vmatpush.bf16.msra.mxu0 %v345
    %419 = vmatpush.bf16.msra.mxu0 %v344
    %420 = vmatpush.bf16.msra.mxu0 %v343
    %421 = vmatpush.bf16.msra.mxu0 %v342
    %422 = vmatpush.bf16.msra.mxu0 %v341
    %423 = vmatmul.bf16.gmra.mxu0 %v67
    %v424 = vpop.f32.mrf.mxu0
    %v425 = vadd.f32 %v412, %v424
    %v426 = vpop.f32.mrf.mxu0
    %427 = vdwg.mxu0
    %428 = vmatpush.bf16.msra.mxu0 %v356
    %429 = vmatpush.bf16.msra.mxu0 %v355
    %430 = vmatpush.bf16.msra.mxu0 %v354
    %431 = vmatpush.bf16.msra.mxu0 %v353
    %432 = vmatpush.bf16.msra.mxu0 %v352
    %433 = vmatpush.bf16.msra.mxu0 %v351
    %434 = vmatpush.bf16.msra.mxu0 %v350
    %435 = vmatpush.bf16.msra.mxu0 %v349
    %436 = vmatmul.bf16.gmra.mxu0 %v68
    %v437 = vpop.f32.mrf.mxu0
    %v438 = vadd.f32 %v425, %v437
    %v439 = vpop.f32.mrf.mxu0
    %440 = vdwg.mxu0
    %v505 = vunpack.c.l.b16 %v69
    %v506 = vunpack.c.l.b16 %v70
    %v507 = vunpack.c.l.b16 %v71
    %v508 = vunpack.c.l.b16 %v72
    %v509 = vunpack.c.l.b16 %v73
    %v510 = vunpack.c.l.b16 %v74
    %v511 = vunpack.c.l.b16 %v75
    %v512 = vunpack.c.l.b16 %v76
    %v513 = vunpack.c.l.b16 %v77
    %v514 = vunpack.c.l.b16 %v78
    %v515 = vunpack.c.l.b16 %v79
    %v516 = vunpack.c.l.b16 %v80
    %v517 = vunpack.c.l.b16 %v81
    %v518 = vunpack.c.l.b16 %v82
    %v519 = vunpack.c.l.b16 %v83
    %v520 = vunpack.c.l.b16 %v84
    %v521 = vunpack.c.l.b16 %v85
    %v522 = vunpack.c.l.b16 %v86
    %v523 = vunpack.c.l.b16 %v87
    %v524 = vunpack.c.l.b16 %v88
    %v525 = vunpack.c.l.b16 %v89
    %v526 = vunpack.c.l.b16 %v90
    %v527 = vunpack.c.l.b16 %v91
    %v528 = vunpack.c.l.b16 %v92
    %v529 = vunpack.c.l.b16 %v93
    %v530 = vunpack.c.l.b16 %v94
    %v531 = vunpack.c.l.b16 %v95
    %v532 = vunpack.c.l.b16 %v96
    %v533 = vunpack.c.l.b16 %v97
    %v534 = vunpack.c.l.b16 %v98
    %v535 = vunpack.c.l.b16 %v99
    %v536 = vunpack.c.l.b16 %v100
    %v537 = vunpack.c.l.b16 %v101
    %v538 = vunpack.c.l.b16 %v102
    %v539 = vunpack.c.l.b16 %v103
    %v540 = vunpack.c.l.b16 %v104
    %v541 = vunpack.c.l.b16 %v105
    %v542 = vunpack.c.l.b16 %v106
    %v543 = vunpack.c.l.b16 %v107
    %v544 = vunpack.c.l.b16 %v108
    %v545 = vunpack.c.l.b16 %v109
    %v546 = vunpack.c.l.b16 %v110
    %v547 = vunpack.c.l.b16 %v111
    %v548 = vunpack.c.l.b16 %v112
    %v549 = vunpack.c.l.b16 %v113
    %v550 = vunpack.c.l.b16 %v114
    %v551 = vunpack.c.l.b16 %v115
    %v552 = vunpack.c.l.b16 %v116
    %v553 = vunpack.c.l.b16 %v117
    %v554 = vunpack.c.l.b16 %v118
    %v555 = vunpack.c.l.b16 %v119
    %v556 = vunpack.c.l.b16 %v120
    %v557 = vunpack.c.l.b16 %v121
    %v558 = vunpack.c.l.b16 %v122
    %v559 = vunpack.c.l.b16 %v123
    %v560 = vunpack.c.l.b16 %v124
    %v561 = vunpack.c.l.b16 %v125
    %v562 = vunpack.c.l.b16 %v126
    %v563 = vunpack.c.l.b16 %v127
    %v564 = vunpack.c.l.b16 %v128
    %v565 = vunpack.c.l.b16 %v129
    %v566 = vunpack.c.l.b16 %v130
    %v567 = vunpack.c.l.b16 %v131
    %v568 = vunpack.c.l.b16 %v132
    %v569 = vpack.c.b16 %v506, %v505
    %v570 = vpack.c.b16 %v508, %v507
    %v571 = vpack.c.b16 %v510, %v509
    %v572 = vpack.c.b16 %v512, %v511
    %v573 = vpack.c.b16 %v514, %v513
    %v574 = vpack.c.b16 %v516, %v515
    %v575 = vpack.c.b16 %v518, %v517
    %v576 = vpack.c.b16 %v520, %v519
    %v577 = vpack.c.b16 %v522, %v521
    %v578 = vpack.c.b16 %v524, %v523
    %v579 = vpack.c.b16 %v526, %v525
    %v580 = vpack.c.b16 %v528, %v527
    %v581 = vpack.c.b16 %v530, %v529
    %v582 = vpack.c.b16 %v532, %v531
    %v583 = vpack.c.b16 %v534, %v533
    %v584 = vpack.c.b16 %v536, %v535
    %v585 = vpack.c.b16 %v538, %v537
    %v586 = vpack.c.b16 %v540, %v539
    %v587 = vpack.c.b16 %v542, %v541
    %v588 = vpack.c.b16 %v544, %v543
    %v589 = vpack.c.b16 %v546, %v545
    %v590 = vpack.c.b16 %v548, %v547
    %v591 = vpack.c.b16 %v550, %v549
    %v592 = vpack.c.b16 %v552, %v551
    %v593 = vpack.c.b16 %v554, %v553
    %v594 = vpack.c.b16 %v556, %v555
    %v595 = vpack.c.b16 %v558, %v557
    %v596 = vpack.c.b16 %v560, %v559
    %v597 = vpack.c.b16 %v562, %v561
    %v598 = vpack.c.b16 %v564, %v563
    %v599 = vpack.c.b16 %v566, %v565
    %v600 = vpack.c.b16 %v568, %v567
    %633 = vmatpush.bf16.msra.mxu0 %v576
    %634 = vmatpush.bf16.msra.mxu0 %v575
    %635 = vmatpush.bf16.msra.mxu0 %v574
    %636 = vmatpush.bf16.msra.mxu0 %v573
    %637 = vmatpush.bf16.msra.mxu0 %v572
    %638 = vmatpush.bf16.msra.mxu0 %v571
    %639 = vmatpush.bf16.msra.mxu0 %v570
    %640 = vmatpush.bf16.msra.mxu0 %v569
    %641 = vmatmul.bf16.gmra.mxu0 %v50
    %v642 = vpop.f32.mrf.mxu0
    %v643 = vadd.f32 %v438, %v642
    %v644 = vpop.f32.mrf.mxu0
    %645 = vdwg.mxu0
    %646 = vmatpush.bf16.msra.mxu0 %v584
    %647 = vmatpush.bf16.msra.mxu0 %v583
    %648 = vmatpush.bf16.msra.mxu0 %v582
    %649 = vmatpush.bf16.msra.mxu0 %v581
    %650 = vmatpush.bf16.msra.mxu0 %v580
    %651 = vmatpush.bf16.msra.mxu0 %v579
    %652 = vmatpush.bf16.msra.mxu0 %v578
    %653 = vmatpush.bf16.msra.mxu0 %v577
    %654 = vmatmul.bf16.gmra.mxu0 %v51
    %v655 = vpop.f32.mrf.mxu0
    %v656 = vadd.f32 %v643, %v655
    %v657 = vpop.f32.mrf.mxu0
    %658 = vdwg.mxu0
    %659 = vmatpush.bf16.msra.mxu0 %v592
    %660 = vmatpush.bf16.msra.mxu0 %v591
    %661 = vmatpush.bf16.msra.mxu0 %v590
    %662 = vmatpush.bf16.msra.mxu0 %v589
    %663 = vmatpush.bf16.msra.mxu0 %v588
    %664 = vmatpush.bf16.msra.mxu0 %v587
    %665 = vmatpush.bf16.msra.mxu0 %v586
    %666 = vmatpush.bf16.msra.mxu0 %v585
    %667 = vmatmul.bf16.gmra.mxu0 %v52
    %v668 = vpop.f32.mrf.mxu0
    %v669 = vadd.f32 %v656, %v668
    %v670 = vpop.f32.mrf.mxu0
    %671 = vdwg.mxu0
    %672 = vmatpush.bf16.msra.mxu0 %v600
    %673 = vmatpush.bf16.msra.mxu0 %v599
    %674 = vmatpush.bf16.msra.mxu0 %v598
    %675 = vmatpush.bf16.msra.mxu0 %v597
    %676 = vmatpush.bf16.msra.mxu0 %v596
    %677 = vmatpush.bf16.msra.mxu0 %v595
    %678 = vmatpush.bf16.msra.mxu0 %v594
    %679 = vmatpush.bf16.msra.mxu0 %v593
    %680 = vmatmul.bf16.gmra.mxu0 %v53
    %v681 = vpop.f32.mrf.mxu0
    %v682 = vadd.f32 %v669, %v681
    %v683 = vpop.f32.mrf.mxu0
    %684 = vdwg.mxu0
    %v685 = vld [vmem:[%s4] sm:$0x1]
    %v687 = vperm.slane %v685, 0
    %v689 = vadd.f32 %v682, %v687
    %v690 = vld [vmem:[%s5] sm:$0xff]
    %v691 = vld [vmem:[%s5 + $0x8] sm:$0xff]
    %v692 = vld [vmem:[%s5 + $0x10] sm:$0xff]
    %v693 = vld [vmem:[%s5 + $0x18] sm:$0xff]
    %v694 = vld [vmem:[%s6] sm:$0x1]
    %v696 = vperm.slane %v694, 0
    %vm698 = vcmask 261120
    %v700 = vsel %vm698, %v689, 0
    %702 = vmatpush.msra.mxu0 0.0
    %703 = vmatpush.msra.mxu0 0.0
    %704 = vmatpush.msra.mxu0 0.0
    %705 = vmatpush.msra.mxu0 0.0
    %706 = vmatpush.msra.mxu0 0.0
    %707 = vmatpush.msra.mxu0 0.0
    %708 = vmatpush.msra.mxu0 0.0
    %709 = vmatpush.msra.mxu0 0.0
    %710 = vmatpush.msra.mxu0 0.0
    %711 = vmatpush.msra.mxu0 0.0
    %712 = vmatpush.msra.mxu0 0.0
    %713 = vmatpush.msra.mxu0 0.0
    %714 = vmatpush.msra.mxu0 %v693
    %715 = vmatpush.msra.mxu0 %v692
    %716 = vmatpush.msra.mxu0 %v691
    %717 = vmatpush.msra.mxu0 %v690
    %718 = vmatmul.f32.gmra.mxu0 %v700
    %v719 = vpop.f32.mrf.mxu0
    %v720 = vadd.f32 %v696, %v719
    %721 = vdwg.mxu0
    %v722 = vmax.f32 %v720, 0.0
    %v723 = vld [vmem:[%s7] sm:$0xff]
    %v724 = vld [vmem:[%s7 + $0x8] sm:$0xff]
    %v725 = vld [vmem:[%s7 + $0x10] sm:$0xff]
    %v726 = vld [vmem:[%s7 + $0x18] sm:$0xff]
    %v727 = vld [vmem:[%s8] sm:$0x1]
    %v729 = vperm.slane %v727, 0
    %v732 = vsel %vm698, %v722, 0
    %734 = vmatpush.msra.mxu0 0.0
    %735 = vmatpush.msra.mxu0 0.0
    %736 = vmatpush.msra.mxu0 0.0
    %737 = vmatpush.msra.mxu0 0.0
    %738 = vmatpush.msra.mxu0 0.0
    %739 = vmatpush.msra.mxu0 0.0
    %740 = vmatpush.msra.mxu0 0.0
    %741 = vmatpush.msra.mxu0 0.0
    %742 = vmatpush.msra.mxu0 0.0
    %743 = vmatpush.msra.mxu0 0.0
    %744 = vmatpush.msra.mxu0 0.0
    %745 = vmatpush.msra.mxu0 0.0
    %746 = vmatpush.msra.mxu0 %v726
    %747 = vmatpush.msra.mxu0 %v725
    %748 = vmatpush.msra.mxu0 %v724
    %749 = vmatpush.msra.mxu0 %v723
    %750 = vmatmul.f32.gmra.mxu0 %v732
    %v751 = vpop.f32.mrf.mxu0
    %v752 = vadd.f32 %v729, %v751
    %753 = vdwg.mxu0
    %v754 = vmax.f32 %v752, 0.0
    %v755 = vld [vmem:[%s9] sm:$0xff]
    %v756 = vld [vmem:[%s9 + $0x8] sm:$0xff]
    %v757 = vld [vmem:[%s9 + $0x10] sm:$0xff]
    %v758 = vld [vmem:[%s9 + $0x18] sm:$0xff]
    %v759 = vld [vmem:[%s10] sm:$0x1]
    %v761 = vperm.slane %v759, 0
    %v764 = vsel %vm698, %v754, 0
    %766 = vmatpush.msra.mxu0 0.0
    %767 = vmatpush.msra.mxu0 0.0
    %768 = vmatpush.msra.mxu0 0.0
    %769 = vmatpush.msra.mxu0 0.0
    %770 = vmatpush.msra.mxu0 0.0
    %771 = vmatpush.msra.mxu0 0.0
    %772 = vmatpush.msra.mxu0 0.0
    %773 = vmatpush.msra.mxu0 0.0
    %774 = vmatpush.msra.mxu0 0.0
    %775 = vmatpush.msra.mxu0 0.0
    %776 = vmatpush.msra.mxu0 0.0
    %777 = vmatpush.msra.mxu0 0.0
    %778 = vmatpush.msra.mxu0 %v758
    %779 = vmatpush.msra.mxu0 %v757
    %780 = vmatpush.msra.mxu0 %v756
    %781 = vmatpush.msra.mxu0 %v755
    %782 = vmatmul.f32.gmra.mxu0 %v764
    %v783 = vpop.f32.mrf.mxu0
    %v784 = vadd.f32 %v761, %v783
    %785 = vdwg.mxu0
    %vm786 = vcmask 9216
    %787 = vst.msk [vmem:[#allocation2] sm:$0x3] %vm786, %v784
    // Predicated region
    $region46: #{masked_coordinate_predictor_forward.3} parent=1 // pred_check
      _
    $region47: #{masked_coordinate_predictor_forward.3} parent=1 // pred_check_branch
      %789 = sbr.rel (0) target = $region49
    $region48: #{masked_coordinate_predictor_forward.3} parent=1 // pred_region
      %791 = vsyncadd [#allocation3], 0
      %s793 = sshll.u32 [#allocation2], 4
      %s794 = int_to_ptr.vmem [resolvable:$true] %s793
      %s795 = sshll.u32 %s11, 4
      %s796 = int_to_ptr.hbm [resolvable:$true] %s795
      %798 = dma.vmem_to_hbm [thread:$0]  %s794, 32, %s796, [#allocation3]
    $region49: #{masked_coordinate_predictor_forward.3} parent=1 // pred_fallthru
      _
    // Predicated region
    $region50: #{masked_coordinate_predictor_forward.3} parent=1 // pred_check
      _
    $region51: #{masked_coordinate_predictor_forward.3} parent=1 // pred_check_branch
      %800 = sbr.rel (0) target = $region53
    $region52: #{masked_coordinate_predictor_forward.3} parent=1 // pred_region
      %802 = dma.done [#allocation3], 32
    $region53: #{masked_coordinate_predictor_forward.3} parent=1 // pred_fallthru
      _
    %803 = vsyncpa [#allocation3], 1

</llo_original>
